<compile_context>
chip_gen: v7x
topology: tpu7x:2x2x1
jax: 0.10.0
libtpu: 0.0.40
codegen_flags: <defaults>
</compile_context>

<pallas_src>
import functools

import jax
import jax.numpy as jnp
from jax.experimental import pallas as pl
from jax.experimental.pallas import tpu as pltpu

INPUT_DIM = 4            # xytc -> (x, y, t, c)
IN_PAD = 8               # layer-0 K padded to one sublane group
HIDDEN = 128
N_HIDDEN_LAYERS = 5
OUT_DIM = 3
OUT_PAD = 8              # output features padded to one sublane group
MAX_TM = 8192            # batch-tile ceiling (lane axis); ~20 MiB VMEM worst case


def _round_up(n, m):
    return ((n + m - 1) // m) * m


def _device_supports_bf16_act():
    """True on TPU generations with a bf16-capable VPU/EUP (v6e, v7x, ...)."""
    try:
        kind = jax.devices()[0].device_kind.lower()
    except Exception:
        return False
    if "tpu" not in kind:
        return False
    for old in ("v2", "v3", "v4", "v5"):
        if old in kind:
            return False          # no bf16 VPU/EUP -> keep activations f32
    return True


def _choose_tm(B):
    tm = min(MAX_TM, _round_up(B, 128))
    # Guarantee >=2 grid steps whenever the batch can be split, so the
    # "parallel" batch axis shards across v7x's two TensorCores.  (On the
    # single-TC v5e/v6e the extra step costs ~0.35 us: negligible.)
    if _round_up(B, 128) >= 256:
        tm = min(tm, _round_up((B + 1) // 2, 128))
    return tm


def _mlp_kernel(x_ref,
                w0, b0, w1, b1, w2, b2, w3, b3, w4, b4, w5, b5,
                o_ref, *, mxu_bf16, act_bf16):
    """6-layer MLP forward for one batch tile, transposed orientation.

    x_ref : (IN_PAD, tm)   f32     features on sublanes, batch on lanes
    w0    : (128, IN_PAD)  f32     b0..b4 : (128, 1) f32
    w1..w4: (128, 128)     f32/bf16
    w5    : (OUT_PAD, 128) f32/bf16 (zero-padded from (3, 128));  b5 : (OUT_PAD, 1) f32
    o_ref : (OUT_PAD, tm)  f32     rows OUT_DIM.. are exact zeros + bias pad; wrapper slices
    """
    dot_dtype = jnp.bfloat16 if mxu_bf16 else jnp.float32
    act_dtype = jnp.bfloat16 if act_bf16 else jnp.float32

    # ---- Layer 0: K = 8 (padded), kept f32 for input precision; cheap on MXU.
    x = x_ref[...]
    z = jnp.dot(w0[...], x, preferred_element_type=jnp.float32) + b0[...]
    h = jnp.tanh(z.astype(act_dtype)).astype(dot_dtype)

    # ---- Hidden layers 1..4: 128x128xTM MXU matmuls (bf16 in, f32 accum);
    #      bias-add + tanh in act_dtype (bf16 on v6e/v7x, f32 on v5e).
    for w, b in ((w1, b1), (w2, b2), (w3, b3), (w4, b4)):
        z = jnp.dot(w[...].astype(dot_dtype), h,
                    preferred_element_type=jnp.float32) + b[...]
        h = jnp.tanh(z.astype(act_dtype)).astype(dot_dtype)

    # ---- Final layer: (OUT_PAD, tm) result, lane-dense unmasked stores.
    out = jnp.dot(w5[...].astype(dot_dtype), h,
                  preferred_element_type=jnp.float32) + b5[...]
    o_ref[...] = out.astype(o_ref.dtype)


def time_control_pinn_forward(x, params, *, tm=None, mxu_bf16=True, act_bf16=None):
    """x: (B, INPUT_DIM) f32.  params: list of (W, b) with W:(in, out), b:(out,)."""
    B, in_dim = x.shape
    assert in_dim == INPUT_DIM
    if act_bf16 is None:
        act_bf16 = mxu_bf16 and _device_supports_bf16_act()

    if tm is None:
        tm = _choose_tm(B)
    assert tm % 128 == 0, "tm must be a multiple of 128 (lane alignment)"

    B_pad = _round_up(B, tm)

    # Input presented transposed + padded: (IN_PAD, B_pad), batch on the lane axis.
    xf = jnp.asarray(x, jnp.float32)
    x_t = jnp.pad(xf, ((0, B_pad - B), (0, IN_PAD - INPUT_DIM))).T

    # Weights in torch layout (out, in); biases as (out, 1) columns.  Final layer
    # zero-padded to OUT_PAD rows; layer-0 K padded to IN_PAD.  Hidden/output
    # weights optionally pre-cast to bf16 (MXU-native input dtype); biases f32.
    flat_args, flat_specs = [], []
    n_layers = len(params)
    for li, (w, b) in enumerate(params):
        w = jnp.asarray(w, jnp.float32).T                  # (out, in)
        b = jnp.asarray(b, jnp.float32).reshape(-1, 1)     # (out, 1)
        if li == 0:
            w = jnp.pad(w, ((0, 0), (0, IN_PAD - INPUT_DIM)))
        if li == n_layers - 1:
            w = jnp.pad(w, ((0, OUT_PAD - w.shape[0]), (0, 0)))
            b = jnp.pad(b, ((0, OUT_PAD - b.shape[0]), (0, 0)))
        if mxu_bf16 and li > 0:
            w = w.astype(jnp.bfloat16)
        flat_args.extend([w, b])
        flat_specs.append(pl.BlockSpec(w.shape, lambda i: (0, 0)))
        flat_specs.append(pl.BlockSpec(b.shape, lambda i: (0, 0)))

    grid = (B_pad // tm,)

    weight_bytes = sum(int(a.size) * a.dtype.itemsize for a in flat_args)
    cost = pl.CostEstimate(
        flops=2 * B_pad * (IN_PAD * HIDDEN
                           + (N_HIDDEN_LAYERS - 1) * HIDDEN * HIDDEN
                           + HIDDEN * OUT_PAD),
        transcendentals=N_HIDDEN_LAYERS * HIDDEN * B_pad,
        bytes_accessed=int(x_t.size) * 4 + OUT_PAD * B_pad * 4 + weight_bytes,
    )

    out_t = pl.pallas_call(
        functools.partial(_mlp_kernel, mxu_bf16=mxu_bf16, act_bf16=act_bf16),
        out_shape=jax.ShapeDtypeStruct((OUT_PAD, B_pad), jnp.float32),
        grid_spec=pltpu.PrefetchScalarGridSpec(
            num_scalar_prefetch=0,
            grid=grid,
            in_specs=[pl.BlockSpec((IN_PAD, tm), lambda i: (0, i))] + flat_specs,
            out_specs=pl.BlockSpec((OUT_PAD, tm), lambda i: (0, i)),
        ),
        compiler_params=pltpu.CompilerParams(
            dimension_semantics=("parallel",),
            vmem_limit_bytes=48 * 1024 * 1024,
        ),
        cost_estimate=cost,
    )(x_t, *flat_args)

    # Drop padded output rows / padded batch and return (B, OUT_DIM).
    return out_t[:OUT_DIM, :B].T


def init_params(key):
    """nn.Linear default init: U(-1/sqrt(fan_in), ...); W stored as (in, out)."""
    layer_sizes = [INPUT_DIM] + [HIDDEN] * N_HIDDEN_LAYERS + [OUT_DIM]
    params = []
    for i in range(len(layer_sizes) - 1):
        fan_in, fan_out = layer_sizes[i], layer_sizes[i + 1]
        key, kw, kb = jax.random.split(key, 3)
        bound = 1.0 / jnp.sqrt(fan_in)
        w = jax.random.uniform(kw, (fan_in, fan_out), jnp.float32, -bound, bound)
        b = jax.random.uniform(kb, (fan_out,), jnp.float32, -bound, bound)
        params.append((w, b))
    return params


def reference_forward_matched(x, params, mxu_bf16=True, act_bf16=False):
    """Pure-JAX reference with the same numeric recipe as the kernel."""
    dt = jnp.bfloat16 if mxu_bf16 else jnp.float32
    at = jnp.bfloat16 if act_bf16 else jnp.float32
    w0, b0 = params[0]
    z = x @ w0 + b0                                       # layer 0 stays f32
    h = jnp.tanh(z.astype(at)).astype(dt)
    for (w, b) in params[1:-1]:
        z = jnp.dot(h, w.astype(dt), preferred_element_type=jnp.float32) + b
        h = jnp.tanh(z.astype(at)).astype(dt)
    w, b = params[-1]
    return jnp.dot(h, w.astype(dt), preferred_element_type=jnp.float32) + b


def reference_forward_f32(x, params):
    """Exact PyTorch-module semantics in f32."""
    h = x
    for (w, b) in params[:-1]:
        h = jnp.tanh(h @ w + b)
    w, b = params[-1]
    return h @ w + b


if __name__ == "__main__":
    key = jax.random.PRNGKey(0)
    key, kx = jax.random.split(key)

    B = 200  # deliberately NOT a multiple of 128: exercises padding + 2-step grid
    x = jax.random.normal(kx, (B, INPUT_DIM), dtype=jnp.float32)
    params = init_params(key)

    act_bf16 = _device_supports_bf16_act()        # same choice the wrapper makes
    out = time_control_pinn_forward(x, params)    # bf16 MXU inputs, auto act dtype
    out = jax.block_until_ready(out)
    assert out.shape == (B, OUT_DIM)

    ref_matched = reference_forward_matched(x, params, mxu_bf16=True, act_bf16=act_bf16)
    ref_f32 = reference_forward_f32(x, params)
    assert jnp.allclose(out, ref_matched, atol=3e-2, rtol=3e-2), \
        "mismatch vs precision-matched JAX reference"
    assert jnp.allclose(out, ref_f32, atol=1e-1, rtol=1e-1), \
        "mismatch vs full-f32 JAX reference"

    print("KERNEL_OK")
</pallas_src>

<mosaic_0001>
module attributes {stable_mosaic.version = 11 : i64} {
  func.func @_mlp_kernel(%arg0: i32, %arg1: memref<8x128xf32, #tpu.memory_space<vmem>>, %arg2: memref<128x8xf32, #tpu.memory_space<vmem>>, %arg3: memref<128x1xf32, #tpu.memory_space<vmem>>, %arg4: memref<128x128xbf16, #tpu.memory_space<vmem>>, %arg5: memref<128x1xf32, #tpu.memory_space<vmem>>, %arg6: memref<128x128xbf16, #tpu.memory_space<vmem>>, %arg7: memref<128x1xf32, #tpu.memory_space<vmem>>, %arg8: memref<128x128xbf16, #tpu.memory_space<vmem>>, %arg9: memref<128x1xf32, #tpu.memory_space<vmem>>, %arg10: memref<128x128xbf16, #tpu.memory_space<vmem>>, %arg11: memref<128x1xf32, #tpu.memory_space<vmem>>, %arg12: memref<8x128xbf16, #tpu.memory_space<vmem>>, %arg13: memref<8x1xf32, #tpu.memory_space<vmem>>, %arg14: memref<8x128xf32, #tpu.memory_space<vmem>>) attributes {dimension_semantics = [#tpu.dimension_semantics<parallel>], iteration_bounds = array<i64: 2>, scalar_prefetch = 0 : i64, scratch_operands = 0 : i64, tpu.core_type = #tpu.core_type<tc>, window_params = [{transform_indices = @transform_0, window_bounds = array<i64: 8, 128>}, {pipeline_mode = #tpu.pipeline_mode<synchronous>, transform_indices = @transform_1, window_bounds = array<i64: 128, 8>}, {pipeline_mode = #tpu.pipeline_mode<synchronous>, transform_indices = @transform_2, window_bounds = array<i64: 128, 1>}, {pipeline_mode = #tpu.pipeline_mode<synchronous>, transform_indices = @transform_3, window_bounds = array<i64: 128, 128>}, {pipeline_mode = #tpu.pipeline_mode<synchronous>, transform_indices = @transform_4, window_bounds = array<i64: 128, 1>}, {pipeline_mode = #tpu.pipeline_mode<synchronous>, transform_indices = @transform_5, window_bounds = array<i64: 128, 128>}, {pipeline_mode = #tpu.pipeline_mode<synchronous>, transform_indices = @transform_6, window_bounds = array<i64: 128, 1>}, {pipeline_mode = #tpu.pipeline_mode<synchronous>, transform_indices = @transform_7, window_bounds = array<i64: 128, 128>}, {pipeline_mode = #tpu.pipeline_mode<synchronous>, transform_indices = @transform_8, window_bounds = array<i64: 128, 1>}, {pipeline_mode = #tpu.pipeline_mode<synchronous>, transform_indices = @transform_9, window_bounds = array<i64: 128, 128>}, {pipeline_mode = #tpu.pipeline_mode<synchronous>, transform_indices = @transform_10, window_bounds = array<i64: 128, 1>}, {pipeline_mode = #tpu.pipeline_mode<synchronous>, transform_indices = @transform_11, window_bounds = array<i64: 8, 128>}, {pipeline_mode = #tpu.pipeline_mode<synchronous>, transform_indices = @transform_12, window_bounds = array<i64: 8, 1>}, {transform_indices = @transform_13, window_bounds = array<i64: 8, 128>}]} {
    %c0 = arith.constant 0 : index
    %c0_0 = arith.constant 0 : index
    %0 = vector.load %arg1[%c0, %c0_0] : memref<8x128xf32, #tpu.memory_space<vmem>>, vector<8x128xf32>
    %c0_1 = arith.constant 0 : index
    %c0_2 = arith.constant 0 : index
    %1 = vector.load %arg2[%c0_1, %c0_2] : memref<128x8xf32, #tpu.memory_space<vmem>>, vector<128x8xf32>
    %cst = arith.constant dense<0.000000e+00> : vector<128x128xf32>
    %2 = tpu.matmul %1, %0, %cst {dimension_numbers = #tpu.dot_dimension_numbers<[1], [0], [0], [1], [0, 0, 1, 1], [], []>} : vector<128x8xf32>, vector<8x128xf32>, vector<128x128xf32> -> vector<128x128xf32>
    %c0_3 = arith.constant 0 : index
    %c0_4 = arith.constant 0 : index
    %3 = vector.load %arg3[%c0_3, %c0_4] : memref<128x1xf32, #tpu.memory_space<vmem>>, vector<128x1xf32>
    %4 = vector.broadcast %3 : vector<128x1xf32> to vector<128x128xf32>
    %5 = arith.addf %2, %4 : vector<128x128xf32>
    %6 = math.tanh %5 : vector<128x128xf32>
    %7 = arith.truncf %6 : vector<128x128xf32> to vector<128x128xbf16>
    %c0_5 = arith.constant 0 : index
    %c0_6 = arith.constant 0 : index
    %8 = vector.load %arg4[%c0_5, %c0_6] : memref<128x128xbf16, #tpu.memory_space<vmem>>, vector<128x128xbf16>
    %cst_7 = arith.constant dense<0.000000e+00> : vector<128x128xf32>
    %9 = tpu.matmul %8, %7, %cst_7 {dimension_numbers = #tpu.dot_dimension_numbers<[1], [0], [0], [1], [0, 0, 1, 1], [], []>} : vector<128x128xbf16>, vector<128x128xbf16>, vector<128x128xf32> -> vector<128x128xf32>
    %c0_8 = arith.constant 0 : index
    %c0_9 = arith.constant 0 : index
    %10 = vector.load %arg5[%c0_8, %c0_9] : memref<128x1xf32, #tpu.memory_space<vmem>>, vector<128x1xf32>
    %11 = vector.broadcast %10 : vector<128x1xf32> to vector<128x128xf32>
    %12 = arith.addf %9, %11 : vector<128x128xf32>
    %13 = math.tanh %12 : vector<128x128xf32>
    %14 = arith.truncf %13 : vector<128x128xf32> to vector<128x128xbf16>
    %c0_10 = arith.constant 0 : index
    %c0_11 = arith.constant 0 : index
    %15 = vector.load %arg6[%c0_10, %c0_11] : memref<128x128xbf16, #tpu.memory_space<vmem>>, vector<128x128xbf16>
    %cst_12 = arith.constant dense<0.000000e+00> : vector<128x128xf32>
    %16 = tpu.matmul %15, %14, %cst_12 {dimension_numbers = #tpu.dot_dimension_numbers<[1], [0], [0], [1], [0, 0, 1, 1], [], []>} : vector<128x128xbf16>, vector<128x128xbf16>, vector<128x128xf32> -> vector<128x128xf32>
    %c0_13 = arith.constant 0 : index
    %c0_14 = arith.constant 0 : index
    %17 = vector.load %arg7[%c0_13, %c0_14] : memref<128x1xf32, #tpu.memory_space<vmem>>, vector<128x1xf32>
    %18 = vector.broadcast %17 : vector<128x1xf32> to vector<128x128xf32>
    %19 = arith.addf %16, %18 : vector<128x128xf32>
    %20 = math.tanh %19 : vector<128x128xf32>
    %21 = arith.truncf %20 : vector<128x128xf32> to vector<128x128xbf16>
    %c0_15 = arith.constant 0 : index
    %c0_16 = arith.constant 0 : index
    %22 = vector.load %arg8[%c0_15, %c0_16] : memref<128x128xbf16, #tpu.memory_space<vmem>>, vector<128x128xbf16>
    %cst_17 = arith.constant dense<0.000000e+00> : vector<128x128xf32>
    %23 = tpu.matmul %22, %21, %cst_17 {dimension_numbers = #tpu.dot_dimension_numbers<[1], [0], [0], [1], [0, 0, 1, 1], [], []>} : vector<128x128xbf16>, vector<128x128xbf16>, vector<128x128xf32> -> vector<128x128xf32>
    %c0_18 = arith.constant 0 : index
    %c0_19 = arith.constant 0 : index
    %24 = vector.load %arg9[%c0_18, %c0_19] : memref<128x1xf32, #tpu.memory_space<vmem>>, vector<128x1xf32>
    %25 = vector.broadcast %24 : vector<128x1xf32> to vector<128x128xf32>
    %26 = arith.addf %23, %25 : vector<128x128xf32>
    %27 = math.tanh %26 : vector<128x128xf32>
    %28 = arith.truncf %27 : vector<128x128xf32> to vector<128x128xbf16>
    %c0_20 = arith.constant 0 : index
    %c0_21 = arith.constant 0 : index
    %29 = vector.load %arg10[%c0_20, %c0_21] : memref<128x128xbf16, #tpu.memory_space<vmem>>, vector<128x128xbf16>
    %cst_22 = arith.constant dense<0.000000e+00> : vector<128x128xf32>
    %30 = tpu.matmul %29, %28, %cst_22 {dimension_numbers = #tpu.dot_dimension_numbers<[1], [0], [0], [1], [0, 0, 1, 1], [], []>} : vector<128x128xbf16>, vector<128x128xbf16>, vector<128x128xf32> -> vector<128x128xf32>
    %c0_23 = arith.constant 0 : index
    %c0_24 = arith.constant 0 : index
    %31 = vector.load %arg11[%c0_23, %c0_24] : memref<128x1xf32, #tpu.memory_space<vmem>>, vector<128x1xf32>
    %32 = vector.broadcast %31 : vector<128x1xf32> to vector<128x128xf32>
    %33 = arith.addf %30, %32 : vector<128x128xf32>
    %34 = math.tanh %33 : vector<128x128xf32>
    %35 = arith.truncf %34 : vector<128x128xf32> to vector<128x128xbf16>
    %c0_25 = arith.constant 0 : index
    %c0_26 = arith.constant 0 : index
    %36 = vector.load %arg12[%c0_25, %c0_26] : memref<8x128xbf16, #tpu.memory_space<vmem>>, vector<8x128xbf16>
    %cst_27 = arith.constant dense<0.000000e+00> : vector<8x128xf32>
    %37 = tpu.matmul %36, %35, %cst_27 {dimension_numbers = #tpu.dot_dimension_numbers<[1], [0], [0], [1], [0, 0, 1, 1], [], []>} : vector<8x128xbf16>, vector<128x128xbf16>, vector<8x128xf32> -> vector<8x128xf32>
    %c0_28 = arith.constant 0 : index
    %c0_29 = arith.constant 0 : index
    %38 = vector.load %arg13[%c0_28, %c0_29] : memref<8x1xf32, #tpu.memory_space<vmem>>, vector<8x1xf32>
    %39 = vector.broadcast %38 : vector<8x1xf32> to vector<8x128xf32>
    %40 = arith.addf %37, %39 : vector<8x128xf32>
    %c0_30 = arith.constant 0 : index
    %c0_31 = arith.constant 0 : index
    %41 = vector.load %arg14[%c0_30, %c0_31] : memref<8x128xf32, #tpu.memory_space<vmem>>, vector<8x128xf32>
    tpu.vector_store %arg14[%c0_30, %c0_31], %40 {strides = array<i32>} : memref<8x128xf32, #tpu.memory_space<vmem>>, vector<8x128xf32>,
    return
  }
  func.func @transform_0(%arg0: i32) -> (i32, i32) {
    %c0_i32 = arith.constant 0 : i32
    %c0_i32_0 = arith.constant 0 : i32
    return %c0_i32, %arg0 : i32, i32
  }
  func.func @transform_1(%arg0: i32) -> (i32, i32) {
    %c0_i32 = arith.constant 0 : i32
    %c0_i32_0 = arith.constant 0 : i32
    %c0_i32_1 = arith.constant 0 : i32
    return %c0_i32, %c0_i32_0 : i32, i32
  }
  func.func @transform_2(%arg0: i32) -> (i32, i32) {
    %c0_i32 = arith.constant 0 : i32
    %c0_i32_0 = arith.constant 0 : i32
    %c0_i32_1 = arith.constant 0 : i32
    return %c0_i32, %c0_i32_0 : i32, i32
  }
  func.func @transform_3(%arg0: i32) -> (i32, i32) {
    %c0_i32 = arith.constant 0 : i32
    %c0_i32_0 = arith.constant 0 : i32
    %c0_i32_1 = arith.constant 0 : i32
    return %c0_i32, %c0_i32_0 : i32, i32
  }
  func.func @transform_4(%arg0: i32) -> (i32, i32) {
    %c0_i32 = arith.constant 0 : i32
    %c0_i32_0 = arith.constant 0 : i32
    %c0_i32_1 = arith.constant 0 : i32
    return %c0_i32, %c0_i32_0 : i32, i32
  }
  func.func @transform_5(%arg0: i32) -> (i32, i32) {
    %c0_i32 = arith.constant 0 : i32
    %c0_i32_0 = arith.constant 0 : i32
    %c0_i32_1 = arith.constant 0 : i32
    return %c0_i32, %c0_i32_0 : i32, i32
  }
  func.func @transform_6(%arg0: i32) -> (i32, i32) {
    %c0_i32 = arith.constant 0 : i32
    %c0_i32_0 = arith.constant 0 : i32
    %c0_i32_1 = arith.constant 0 : i32
    return %c0_i32, %c0_i32_0 : i32, i32
  }
  func.func @transform_7(%arg0: i32) -> (i32, i32) {
    %c0_i32 = arith.constant 0 : i32
    %c0_i32_0 = arith.constant 0 : i32
    %c0_i32_1 = arith.constant 0 : i32
    return %c0_i32, %c0_i32_0 : i32, i32
  }
  func.func @transform_8(%arg0: i32) -> (i32, i32) {
    %c0_i32 = arith.constant 0 : i32
    %c0_i32_0 = arith.constant 0 : i32
    %c0_i32_1 = arith.constant 0 : i32
    return %c0_i32, %c0_i32_0 : i32, i32
  }
  func.func @transform_9(%arg0: i32) -> (i32, i32) {
    %c0_i32 = arith.constant 0 : i32
    %c0_i32_0 = arith.constant 0 : i32
    %c0_i32_1 = arith.constant 0 : i32
    return %c0_i32, %c0_i32_0 : i32, i32
  }
  func.func @transform_10(%arg0: i32) -> (i32, i32) {
    %c0_i32 = arith.constant 0 : i32
    %c0_i32_0 = arith.constant 0 : i32
    %c0_i32_1 = arith.constant 0 : i32
    return %c0_i32, %c0_i32_0 : i32, i32
  }
  func.func @transform_11(%arg0: i32) -> (i32, i32) {
    %c0_i32 = arith.constant 0 : i32
    %c0_i32_0 = arith.constant 0 : i32
    %c0_i32_1 = arith.constant 0 : i32
    return %c0_i32, %c0_i32_0 : i32, i32
  }
  func.func @transform_12(%arg0: i32) -> (i32, i32) {
    %c0_i32 = arith.constant 0 : i32
    %c0_i32_0 = arith.constant 0 : i32
    %c0_i32_1 = arith.constant 0 : i32
    return %c0_i32, %c0_i32_0 : i32, i32
  }
  func.func @transform_13(%arg0: i32) -> (i32, i32) {
    %c0_i32 = arith.constant 0 : i32
    %c0_i32_0 = arith.constant 0 : i32
    return %c0_i32, %arg0 : i32, i32
  }
}

</mosaic_0001>

<llo_original>
// kernel: tpu_custom_call.1
$region0: #{tpu_custom_call.1}
  #allocation0 [shape = 'u32[]', space=smem, size = 0x4, offset = 0x4, fixed_abs, tag = 'smem constant byte address 0x4 - core index']
  #allocation1 [shape = 'u32[144,128]{1,0:T(1,128)}', space=vmem, size = 0x12000, scoped, tag = 'internal scratch']
  %s0 = inlined_call_operand.vmem [shape: f32[8,256], index: 0, kind: input, shape index: {}]
  %s1 = inlined_call_operand.vmem [shape: f32[128,8], index: 1, kind: input, shape index: {}]
  %s2 = inlined_call_operand.vmem [shape: f32[128,1], index: 2, kind: input, shape index: {}]
  %s3 = inlined_call_operand.vmem [shape: bf16[128,128], index: 3, kind: input, shape index: {}]
  %s4 = inlined_call_operand.vmem [shape: f32[128,1], index: 4, kind: input, shape index: {}]
  %s5 = inlined_call_operand.vmem [shape: bf16[128,128], index: 5, kind: input, shape index: {}]
  %s6 = inlined_call_operand.vmem [shape: f32[128,1], index: 6, kind: input, shape index: {}]
  %s7 = inlined_call_operand.vmem [shape: bf16[128,128], index: 7, kind: input, shape index: {}]
  %s8 = inlined_call_operand.vmem [shape: f32[128,1], index: 8, kind: input, shape index: {}]
  %s9 = inlined_call_operand.vmem [shape: bf16[128,128], index: 9, kind: input, shape index: {}]
  %s10 = inlined_call_operand.vmem [shape: f32[128,1], index: 10, kind: input, shape index: {}]
  %s11 = inlined_call_operand.vmem [shape: bf16[8,128], index: 11, kind: input, shape index: {}]
  %s12 = inlined_call_operand.vmem [shape: f32[8,1], index: 12, kind: input, shape index: {}]
  %s13 = inlined_call_operand.hbm [shape: f32[8,256], index: 13, kind: output, shape index: {}]
  %s14 = sld [smem:[#allocation0]]
  $region85: #{tpu_custom_call.1} parent=0
    _
  %s16 = ssub.s32 1, %s14
  %s17 = scalar_select 0, %s16, %s14
  $region1: #{tpu_custom_call.1} parent=0
    #allocation2 [shape = 'u8[8192]{0}', space=vmem, size = 0x2000, scoped, tag = 'output window, operand 0']
    #allocation3 [shape = 's32[2]{0}', space=sflag, size = 0x8, scoped, tag = 'scoped memory for tpu_custom_call.1']
    %18 = vsyncpa [#allocation3], 0
    %s19 = scalar_lea.sflag [#allocation3], 1
    %20 = vsyncpa %s19, 0
    loop: start=0, step=1, limit=4
    $region2: #{tpu_custom_call.1} parent=1 // loop_pre_header
      _
    $region3: #{tpu_custom_call.1} parent=1 // loop_header
      %s22 = sphi 0, %s26
      %p23 = scmp.ge.s32.totalorder %s22, 4
      %s32 = sphi 0, %s34
      %s35 = sphi 0, %s32
      %s36 = sphi 0, %s35
      %s52 = sphi 0, %s36
      %s56 = sphi 0, %s56
      %s58 = sphi 0, %s56
      %s59 = sphi 0, %s58
      %s73 = sphi 0, %s59
      %s77 = sphi 0, %s77
      %s79 = sphi 0, %s77
      %s80 = sphi 0, %s79
      %s94 = sphi 0, %s80
      %s98 = sphi 0, %s98
      %s100 = sphi 0, %s98
      %s101 = sphi 0, %s100
      %s115 = sphi 0, %s101
      %s119 = sphi 0, %s119
      %s121 = sphi 0, %s119
      %s122 = sphi 0, %s121
      %s136 = sphi 0, %s122
      %s140 = sphi 0, %s140
      %s142 = sphi 0, %s140
      %s143 = sphi 0, %s142
      %s157 = sphi 0, %s143
      %s161 = sphi 0, %s161
      %s163 = sphi 0, %s161
      %s164 = sphi 0, %s163
      %s178 = sphi 0, %s164
      %s182 = sphi 0, %s182
      %s184 = sphi 0, %s182
      %s185 = sphi 0, %s184
      %s199 = sphi 0, %s185
      %s203 = sphi 0, %s203
      %s205 = sphi 0, %s203
      %s206 = sphi 0, %s205
      %s220 = sphi 0, %s206
      %s224 = sphi 0, %s224
      %s226 = sphi 0, %s224
      %s227 = sphi 0, %s226
      %s241 = sphi 0, %s227
      %s245 = sphi 0, %s245
      %s247 = sphi 0, %s245
      %s248 = sphi 0, %s247
      %s262 = sphi 0, %s248
      %s266 = sphi 0, %s266
      %s268 = sphi 0, %s266
      %s269 = sphi 0, %s268
      %s283 = sphi 0, %s269
      %s287 = sphi 0, %s287
      %s289 = sphi 0, %s287
      %s290 = sphi 0, %s289
      %s304 = sphi 0, %s290
      %s310 = sphi 0, %s312
      %s313 = sphi 0, %s310
      %s314 = sphi 0, %s313
      %s330 = sphi 0, %s314
    $region4: #{tpu_custom_call.1} parent=1 // loop_header_branch
      %25 = sbr.rel (%p23) target = $region8
    $region5: #{tpu_custom_call.1} parent=1 // loop_body
      %s27 = ssub.s32 %s22, 1
      %s28 = ssub.s32 %s22, 2
      %s29 = sadd.s32 %s22, 1
      %s30 = ssub.s32 %s22, %s29
      %p31 = scmp.eq.s32.totalorder %s30, 0
      %s33 = sadd.s32 %s32, 1
      %s34 = scalar_select %p31, %s32, %s33
      %p37 = pneg %p31
      %p38 = scmp.eq.s32.totalorder %s22, 1
      %p39 = por %p37, %p38
      %p40 = scmp.ne.s32.totalorder %s32, %s35
      %p41 = scmp.eq.s32.totalorder %s22, 0
      %p42 = por %p40, %p41
      %p43 = scmp.ne.s32.totalorder %s32, %s35
      %p44 = scmp.eq.s32.totalorder %s27, 1
      %p45 = por %p43, %p44
      %p46 = scmp.ne.s32.totalorder %s35, %s36
      %p47 = scmp.eq.s32.totalorder %s27, 0
      %p48 = por %p46, %p47
      %p49 = scmp.ne.s32.totalorder %s35, %s36
      %p50 = scmp.eq.s32.totalorder %s28, 1
      %p51 = por %p49, %p50
      %p53 = scmp.ne.s32.totalorder %s36, %s52
      %p54 = scmp.eq.s32.totalorder %s28, 0
      %p55 = por %p53, %p54
      %s57 = sadd.s32 %s56, 1
      %p60 = scmp.eq.s32.totalorder %s22, 1
      %p61 = scmp.ne.s32.totalorder %s56, %s58
      %p62 = scmp.eq.s32.totalorder %s22, 0
      %p63 = por %p61, %p62
      %p64 = scmp.ne.s32.totalorder %s56, %s58
      %p65 = scmp.eq.s32.totalorder %s27, 1
      %p66 = por %p64, %p65
      %p67 = scmp.ne.s32.totalorder %s58, %s59
      %p68 = scmp.eq.s32.totalorder %s27, 0
      %p69 = por %p67, %p68
      %p70 = scmp.ne.s32.totalorder %s58, %s59
      %p71 = scmp.eq.s32.totalorder %s28, 1
      %p72 = por %p70, %p71
      %p74 = scmp.ne.s32.totalorder %s59, %s73
      %p75 = scmp.eq.s32.totalorder %s28, 0
      %p76 = por %p74, %p75
      %s78 = sadd.s32 %s77, 1
      %p81 = scmp.eq.s32.totalorder %s22, 1
      %p82 = scmp.ne.s32.totalorder %s77, %s79
      %p83 = scmp.eq.s32.totalorder %s22, 0
      %p84 = por %p82, %p83
      %p85 = scmp.ne.s32.totalorder %s77, %s79
      %p86 = scmp.eq.s32.totalorder %s27, 1
      %p87 = por %p85, %p86
      %p88 = scmp.ne.s32.totalorder %s79, %s80
      %p89 = scmp.eq.s32.totalorder %s27, 0
      %p90 = por %p88, %p89
      %p91 = scmp.ne.s32.totalorder %s79, %s80
      %p92 = scmp.eq.s32.totalorder %s28, 1
      %p93 = por %p91, %p92
      %p95 = scmp.ne.s32.totalorder %s80, %s94
      %p96 = scmp.eq.s32.totalorder %s28, 0
      %p97 = por %p95, %p96
      %s99 = sadd.s32 %s98, 1
      %p102 = scmp.eq.s32.totalorder %s22, 1
      %p103 = scmp.ne.s32.totalorder %s98, %s100
      %p104 = scmp.eq.s32.totalorder %s22, 0
      %p105 = por %p103, %p104
      %p106 = scmp.ne.s32.totalorder %s98, %s100
      %p107 = scmp.eq.s32.totalorder %s27, 1
      %p108 = por %p106, %p107
      %p109 = scmp.ne.s32.totalorder %s100, %s101
      %p110 = scmp.eq.s32.totalorder %s27, 0
      %p111 = por %p109, %p110
      %p112 = scmp.ne.s32.totalorder %s100, %s101
      %p113 = scmp.eq.s32.totalorder %s28, 1
      %p114 = por %p112, %p113
      %p116 = scmp.ne.s32.totalorder %s101, %s115
      %p117 = scmp.eq.s32.totalorder %s28, 0
      %p118 = por %p116, %p117
      %s120 = sadd.s32 %s119, 1
      %p123 = scmp.eq.s32.totalorder %s22, 1
      %p124 = scmp.ne.s32.totalorder %s119, %s121
      %p125 = scmp.eq.s32.totalorder %s22, 0
      %p126 = por %p124, %p125
      %p127 = scmp.ne.s32.totalorder %s119, %s121
      %p128 = scmp.eq.s32.totalorder %s27, 1
      %p129 = por %p127, %p128
      %p130 = scmp.ne.s32.totalorder %s121, %s122
      %p131 = scmp.eq.s32.totalorder %s27, 0
      %p132 = por %p130, %p131
      %p133 = scmp.ne.s32.totalorder %s121, %s122
      %p134 = scmp.eq.s32.totalorder %s28, 1
      %p135 = por %p133, %p134
      %p137 = scmp.ne.s32.totalorder %s122, %s136
      %p138 = scmp.eq.s32.totalorder %s28, 0
      %p139 = por %p137, %p138
      %s141 = sadd.s32 %s140, 1
      %p144 = scmp.eq.s32.totalorder %s22, 1
      %p145 = scmp.ne.s32.totalorder %s140, %s142
      %p146 = scmp.eq.s32.totalorder %s22, 0
      %p147 = por %p145, %p146
      %p148 = scmp.ne.s32.totalorder %s140, %s142
      %p149 = scmp.eq.s32.totalorder %s27, 1
      %p150 = por %p148, %p149
      %p151 = scmp.ne.s32.totalorder %s142, %s143
      %p152 = scmp.eq.s32.totalorder %s27, 0
      %p153 = por %p151, %p152
      %p154 = scmp.ne.s32.totalorder %s142, %s143
      %p155 = scmp.eq.s32.totalorder %s28, 1
      %p156 = por %p154, %p155
      %p158 = scmp.ne.s32.totalorder %s143, %s157
      %p159 = scmp.eq.s32.totalorder %s28, 0
      %p160 = por %p158, %p159
      %s162 = sadd.s32 %s161, 1
      %p165 = scmp.eq.s32.totalorder %s22, 1
      %p166 = scmp.ne.s32.totalorder %s161, %s163
      %p167 = scmp.eq.s32.totalorder %s22, 0
      %p168 = por %p166, %p167
      %p169 = scmp.ne.s32.totalorder %s161, %s163
      %p170 = scmp.eq.s32.totalorder %s27, 1
      %p171 = por %p169, %p170
      %p172 = scmp.ne.s32.totalorder %s163, %s164
      %p173 = scmp.eq.s32.totalorder %s27, 0
      %p174 = por %p172, %p173
      %p175 = scmp.ne.s32.totalorder %s163, %s164
      %p176 = scmp.eq.s32.totalorder %s28, 1
      %p177 = por %p175, %p176
      %p179 = scmp.ne.s32.totalorder %s164, %s178
      %p180 = scmp.eq.s32.totalorder %s28, 0
      %p181 = por %p179, %p180
      %s183 = sadd.s32 %s182, 1
      %p186 = scmp.eq.s32.totalorder %s22, 1
      %p187 = scmp.ne.s32.totalorder %s182, %s184
      %p188 = scmp.eq.s32.totalorder %s22, 0
      %p189 = por %p187, %p188
      %p190 = scmp.ne.s32.totalorder %s182, %s184
      %p191 = scmp.eq.s32.totalorder %s27, 1
      %p192 = por %p190, %p191
      %p193 = scmp.ne.s32.totalorder %s184, %s185
      %p194 = scmp.eq.s32.totalorder %s27, 0
      %p195 = por %p193, %p194
      %p196 = scmp.ne.s32.totalorder %s184, %s185
      %p197 = scmp.eq.s32.totalorder %s28, 1
      %p198 = por %p196, %p197
      %p200 = scmp.ne.s32.totalorder %s185, %s199
      %p201 = scmp.eq.s32.totalorder %s28, 0
      %p202 = por %p200, %p201
      %s204 = sadd.s32 %s203, 1
      %p207 = scmp.eq.s32.totalorder %s22, 1
      %p208 = scmp.ne.s32.totalorder %s203, %s205
      %p209 = scmp.eq.s32.totalorder %s22, 0
      %p210 = por %p208, %p209
      %p211 = scmp.ne.s32.totalorder %s203, %s205
      %p212 = scmp.eq.s32.totalorder %s27, 1
      %p213 = por %p211, %p212
      %p214 = scmp.ne.s32.totalorder %s205, %s206
      %p215 = scmp.eq.s32.totalorder %s27, 0
      %p216 = por %p214, %p215
      %p217 = scmp.ne.s32.totalorder %s205, %s206
      %p218 = scmp.eq.s32.totalorder %s28, 1
      %p219 = por %p217, %p218
      %p221 = scmp.ne.s32.totalorder %s206, %s220
      %p222 = scmp.eq.s32.totalorder %s28, 0
      %p223 = por %p221, %p222
      %s225 = sadd.s32 %s224, 1
      %p228 = scmp.eq.s32.totalorder %s22, 1
      %p229 = scmp.ne.s32.totalorder %s224, %s226
      %p230 = scmp.eq.s32.totalorder %s22, 0
      %p231 = por %p229, %p230
      %p232 = scmp.ne.s32.totalorder %s224, %s226
      %p233 = scmp.eq.s32.totalorder %s27, 1
      %p234 = por %p232, %p233
      %p235 = scmp.ne.s32.totalorder %s226, %s227
      %p236 = scmp.eq.s32.totalorder %s27, 0
      %p237 = por %p235, %p236
      %p238 = scmp.ne.s32.totalorder %s226, %s227
      %p239 = scmp.eq.s32.totalorder %s28, 1
      %p240 = por %p238, %p239
      %p242 = scmp.ne.s32.totalorder %s227, %s241
      %p243 = scmp.eq.s32.totalorder %s28, 0
      %p244 = por %p242, %p243
      %s246 = sadd.s32 %s245, 1
      %p249 = scmp.eq.s32.totalorder %s22, 1
      %p250 = scmp.ne.s32.totalorder %s245, %s247
      %p251 = scmp.eq.s32.totalorder %s22, 0
      %p252 = por %p250, %p251
      %p253 = scmp.ne.s32.totalorder %s245, %s247
      %p254 = scmp.eq.s32.totalorder %s27, 1
      %p255 = por %p253, %p254
      %p256 = scmp.ne.s32.totalorder %s247, %s248
      %p257 = scmp.eq.s32.totalorder %s27, 0
      %p258 = por %p256, %p257
      %p259 = scmp.ne.s32.totalorder %s247, %s248
      %p260 = scmp.eq.s32.totalorder %s28, 1
      %p261 = por %p259, %p260
      %p263 = scmp.ne.s32.totalorder %s248, %s262
      %p264 = scmp.eq.s32.totalorder %s28, 0
      %p265 = por %p263, %p264
      %s267 = sadd.s32 %s266, 1
      %p270 = scmp.eq.s32.totalorder %s22, 1
      %p271 = scmp.ne.s32.totalorder %s266, %s268
      %p272 = scmp.eq.s32.totalorder %s22, 0
      %p273 = por %p271, %p272
      %p274 = scmp.ne.s32.totalorder %s266, %s268
      %p275 = scmp.eq.s32.totalorder %s27, 1
      %p276 = por %p274, %p275
      %p277 = scmp.ne.s32.totalorder %s268, %s269
      %p278 = scmp.eq.s32.totalorder %s27, 0
      %p279 = por %p277, %p278
      %p280 = scmp.ne.s32.totalorder %s268, %s269
      %p281 = scmp.eq.s32.totalorder %s28, 1
      %p282 = por %p280, %p281
      %p284 = scmp.ne.s32.totalorder %s269, %s283
      %p285 = scmp.eq.s32.totalorder %s28, 0
      %p286 = por %p284, %p285
      %s288 = sadd.s32 %s287, 1
      %p291 = scmp.eq.s32.totalorder %s22, 1
      %p292 = scmp.ne.s32.totalorder %s287, %s289
      %p293 = scmp.eq.s32.totalorder %s22, 0
      %p294 = por %p292, %p293
      %p295 = scmp.ne.s32.totalorder %s287, %s289
      %p296 = scmp.eq.s32.totalorder %s27, 1
      %p297 = por %p295, %p296
      %p298 = scmp.ne.s32.totalorder %s289, %s290
      %p299 = scmp.eq.s32.totalorder %s27, 0
      %p300 = por %p298, %p299
      %p301 = scmp.ne.s32.totalorder %s289, %s290
      %p302 = scmp.eq.s32.totalorder %s28, 1
      %p303 = por %p301, %p302
      %p305 = scmp.ne.s32.totalorder %s290, %s304
      %p306 = scmp.eq.s32.totalorder %s28, 0
      %p307 = por %p305, %p306
      %s308 = ssub.s32 %s22, %s29
      %p309 = scmp.eq.s32.totalorder %s308, 0
      %s311 = sadd.s32 %s310, 1
      %s312 = scalar_select %p309, %s310, %s311
      %p315 = pneg %p309
      %p316 = scmp.eq.s32.totalorder %s22, 1
      %p317 = por %p315, %p316
      %p318 = scmp.ne.s32.totalorder %s310, %s313
      %p319 = scmp.eq.s32.totalorder %s22, 0
      %p320 = por %p318, %p319
      %p321 = scmp.ne.s32.totalorder %s310, %s313
      %p322 = scmp.eq.s32.totalorder %s27, 1
      %p323 = por %p321, %p322
      %p324 = scmp.ne.s32.totalorder %s313, %s314
      %p325 = scmp.eq.s32.totalorder %s27, 0
      %p326 = por %p324, %p325
      %p327 = scmp.ne.s32.totalorder %s313, %s314
      %p328 = scmp.eq.s32.totalorder %s28, 1
      %p329 = por %p327, %p328
      %p331 = scmp.ne.s32.totalorder %s314, %s330
      %p332 = scmp.eq.s32.totalorder %s28, 0
      %p333 = por %p331, %p332
      %p334 = scmp.le.s32.totalorder 1, %s22
      %p335 = scmp.lt.s32.totalorder %s22, 3
      %p336 = pnand %p334, %p335
      %p337 = pneg %p336
      // Predicated region
      $region9: #{tpu_custom_call.1} parent=5 // pred_check
        _
      $region10: #{tpu_custom_call.1} parent=5 // pred_check_branch
        %339 = sbr.rel (%p336) target = $region12
      $region11: #{tpu_custom_call.1} parent=5 // pred_region
        %s340 = ssub.s32 %s22, 1
        // Predicated region
        $region13: #{tpu_custom_call.1} parent=11 // pred_check
          %p341 = pneg %p69
        $region14: #{tpu_custom_call.1} parent=11 // pred_check_branch
          %343 = sbr.rel (%p341) target = $region16
        $region15: #{tpu_custom_call.1} parent=11 // pred_region
          _
        $region16: #{tpu_custom_call.1} parent=11 // pred_fallthru
          _
        // Predicated region
        $region17: #{tpu_custom_call.1} parent=11 // pred_check
          %p344 = pneg %p90
        $region18: #{tpu_custom_call.1} parent=11 // pred_check_branch
          %346 = sbr.rel (%p344) target = $region20
        $region19: #{tpu_custom_call.1} parent=11 // pred_region
          _
        $region20: #{tpu_custom_call.1} parent=11 // pred_fallthru
          _
        // Predicated region
        $region21: #{tpu_custom_call.1} parent=11 // pred_check
          %p347 = pneg %p111
        $region22: #{tpu_custom_call.1} parent=11 // pred_check_branch
          %349 = sbr.rel (%p347) target = $region24
        $region23: #{tpu_custom_call.1} parent=11 // pred_region
          _
        $region24: #{tpu_custom_call.1} parent=11 // pred_fallthru
          _
        // Predicated region
        $region25: #{tpu_custom_call.1} parent=11 // pred_check
          %p350 = pneg %p132
        $region26: #{tpu_custom_call.1} parent=11 // pred_check_branch
          %352 = sbr.rel (%p350) target = $region28
        $region27: #{tpu_custom_call.1} parent=11 // pred_region
          _
        $region28: #{tpu_custom_call.1} parent=11 // pred_fallthru
          _
        // Predicated region
        $region29: #{tpu_custom_call.1} parent=11 // pred_check
          %p353 = pneg %p153
        $region30: #{tpu_custom_call.1} parent=11 // pred_check_branch
          %355 = sbr.rel (%p353) target = $region32
        $region31: #{tpu_custom_call.1} parent=11 // pred_region
          _
        $region32: #{tpu_custom_call.1} parent=11 // pred_fallthru
          _
        // Predicated region
        $region33: #{tpu_custom_call.1} parent=11 // pred_check
          %p356 = pneg %p174
        $region34: #{tpu_custom_call.1} parent=11 // pred_check_branch
          %358 = sbr.rel (%p356) target = $region36
        $region35: #{tpu_custom_call.1} parent=11 // pred_region
          _
        $region36: #{tpu_custom_call.1} parent=11 // pred_fallthru
          _
        // Predicated region
        $region37: #{tpu_custom_call.1} parent=11 // pred_check
          %p359 = pneg %p195
        $region38: #{tpu_custom_call.1} parent=11 // pred_check_branch
          %361 = sbr.rel (%p359) target = $region40
        $region39: #{tpu_custom_call.1} parent=11 // pred_region
          _
        $region40: #{tpu_custom_call.1} parent=11 // pred_fallthru
          _
        // Predicated region
        $region41: #{tpu_custom_call.1} parent=11 // pred_check
          %p362 = pneg %p216
        $region42: #{tpu_custom_call.1} parent=11 // pred_check_branch
          %364 = sbr.rel (%p362) target = $region44
        $region43: #{tpu_custom_call.1} parent=11 // pred_region
          _
        $region44: #{tpu_custom_call.1} parent=11 // pred_fallthru
          _
        // Predicated region
        $region45: #{tpu_custom_call.1} parent=11 // pred_check
          %p365 = pneg %p237
        $region46: #{tpu_custom_call.1} parent=11 // pred_check_branch
          %367 = sbr.rel (%p365) target = $region48
        $region47: #{tpu_custom_call.1} parent=11 // pred_region
          _
        $region48: #{tpu_custom_call.1} parent=11 // pred_fallthru
          _
        // Predicated region
        $region49: #{tpu_custom_call.1} parent=11 // pred_check
          %p368 = pneg %p258
        $region50: #{tpu_custom_call.1} parent=11 // pred_check_branch
          %370 = sbr.rel (%p368) target = $region52
        $region51: #{tpu_custom_call.1} parent=11 // pred_region
          _
        $region52: #{tpu_custom_call.1} parent=11 // pred_fallthru
          _
        // Predicated region
        $region53: #{tpu_custom_call.1} parent=11 // pred_check
          %p371 = pneg %p279
        $region54: #{tpu_custom_call.1} parent=11 // pred_check_branch
          %373 = sbr.rel (%p371) target = $region56
        $region55: #{tpu_custom_call.1} parent=11 // pred_region
          _
        $region56: #{tpu_custom_call.1} parent=11 // pred_fallthru
          _
        // Predicated region
        $region57: #{tpu_custom_call.1} parent=11 // pred_check
          %p374 = pneg %p300
        $region58: #{tpu_custom_call.1} parent=11 // pred_check_branch
          %376 = sbr.rel (%p374) target = $region60
        $region59: #{tpu_custom_call.1} parent=11 // pred_region
          _
        $region60: #{tpu_custom_call.1} parent=11 // pred_fallthru
          _
      $region12: #{tpu_custom_call.1} parent=5 // pred_fallthru
        _
      %p377 = scmp.lt.s32.totalorder %s22, 2
      // Predicated region
      $region61: #{tpu_custom_call.1} parent=5 // pred_check
        %p378 = pneg %p377
      $region62: #{tpu_custom_call.1} parent=5 // pred_check_branch
        %380 = sbr.rel (%p378) target = $region64
      $region63: #{tpu_custom_call.1} parent=5 // pred_region
        // Predicated region
        $region65: #{tpu_custom_call.1} parent=63 // pred_check
          %p381 = pneg %p42
        $region66: #{tpu_custom_call.1} parent=63 // pred_check_branch
          %383 = sbr.rel (%p381) target = $region68
        $region67: #{tpu_custom_call.1} parent=63 // pred_region
          %p384 = scmp.lt.s32.totalorder %s22, 1
          %s385 = scalar_select %p384, %s22, 1
          %s386 = smul.addr %s385, 8
          %s387 = scalar_lea.vmem %s0, %s386
        $region68: #{tpu_custom_call.1} parent=63 // pred_fallthru
          _
      $region64: #{tpu_custom_call.1} parent=5 // pred_fallthru
        _
      %p388 = scmp.le.s32.totalorder 1, %s22
      %p389 = scmp.lt.s32.totalorder %s22, 3
      %p390 = pnand %p388, %p389
      %p391 = pneg %p390
      // Predicated region
      $region69: #{tpu_custom_call.1} parent=5 // pred_check
        _
      $region70: #{tpu_custom_call.1} parent=5 // pred_check_branch
        %393 = sbr.rel (%p390) target = $region72
      $region71: #{tpu_custom_call.1} parent=5 // pred_region
        %s394 = ssub.s32 %s22, 1
        %p395 = scmp.lt.s32.totalorder %s27, 1
        %s396 = scalar_select %p395, %s27, 1
        %s397 = smul.addr %s396, 8
        %s398 = scalar_lea.vmem %s0, %s397
        %p399 = pneg %p48
        %p400 = pneg %p45
        %p401 = pneg %p69
        %p402 = pneg %p66
        %p403 = pneg %p90
        %p404 = pneg %p87
        %p405 = pneg %p111
        %p406 = pneg %p108
        %p407 = pneg %p132
        %p408 = pneg %p129
        %p409 = pneg %p153
        %p410 = pneg %p150
        %p411 = pneg %p174
        %p412 = pneg %p171
        %p413 = pneg %p195
        %p414 = pneg %p192
        %p415 = pneg %p216
        %p416 = pneg %p213
        %p417 = pneg %p237
        %p418 = pneg %p234
        %p419 = pneg %p258
        %p420 = pneg %p255
        %p421 = pneg %p279
        %p422 = pneg %p276
        %p423 = pneg %p300
        %p424 = pneg %p297
        %p425 = pneg %p326
        %p426 = pneg %p323
        %s427 = sand.u32 %s313, 1
        %s428 = scalar_lea.sflag [#allocation3], %s427
        %s429 = sand.u32 %s313, 1
        %s430 = smul.addr %s429, 8
        %s431 = scalar_lea.vmem [#allocation2], %s430
        %p432 = scmp.lt.s32.totalorder %s27, 1
        %s433 = scalar_select %p432, %s27, 1
        %s434 = smul.addr %s433, 8
        %s435 = scalar_lea.vmem %s0, %s434
        %v437 = vld [vmem:[%s435] sm:$0xff]
        %v438 = vld [vmem:[%s1] sm:$0xff]
        %v439 = vld [vmem:[%s1 + $0x8] sm:$0xff]
        %v440 = vld [vmem:[%s1 + $0x10] sm:$0xff]
        %v441 = vld [vmem:[%s1 + $0x18] sm:$0xff]
        %v442 = vld [vmem:[%s1 + $0x20] sm:$0xff]
        %v443 = vld [vmem:[%s1 + $0x28] sm:$0xff]
        %v444 = vld [vmem:[%s1 + $0x30] sm:$0xff]
        %v445 = vld [vmem:[%s1 + $0x38] sm:$0xff]
        %v446 = vld [vmem:[%s1 + $0x40] sm:$0xff]
        %v447 = vld [vmem:[%s1 + $0x48] sm:$0xff]
        %v448 = vld [vmem:[%s1 + $0x50] sm:$0xff]
        %v449 = vld [vmem:[%s1 + $0x58] sm:$0xff]
        %v450 = vld [vmem:[%s1 + $0x60] sm:$0xff]
        %v451 = vld [vmem:[%s1 + $0x68] sm:$0xff]
        %v452 = vld [vmem:[%s1 + $0x70] sm:$0xff]
        %v453 = vld [vmem:[%s1 + $0x78] sm:$0xff]
        %v454 = vld [vmem:[%s2] sm:$0xff]
        %v455 = vld [vmem:[%s2 + $0x8] sm:$0xff]
        %v456 = vld [vmem:[%s2 + $0x10] sm:$0xff]
        %v457 = vld [vmem:[%s2 + $0x18] sm:$0xff]
        %v458 = vld [vmem:[%s2 + $0x20] sm:$0xff]
        %v459 = vld [vmem:[%s2 + $0x28] sm:$0xff]
        %v460 = vld [vmem:[%s2 + $0x30] sm:$0xff]
        %v461 = vld [vmem:[%s2 + $0x38] sm:$0xff]
        %v462 = vld [vmem:[%s2 + $0x40] sm:$0xff]
        %v463 = vld [vmem:[%s2 + $0x48] sm:$0xff]
        %v464 = vld [vmem:[%s2 + $0x50] sm:$0xff]
        %v465 = vld [vmem:[%s2 + $0x58] sm:$0xff]
        %v466 = vld [vmem:[%s2 + $0x60] sm:$0xff]
        %v467 = vld [vmem:[%s2 + $0x68] sm:$0xff]
        %v468 = vld [vmem:[%s2 + $0x70] sm:$0xff]
        %v469 = vld [vmem:[%s2 + $0x78] sm:$0xff]
        %471 = vset.pattern.permute.xlu0 0
        %472 = vperm.xlu0 %471, %v454
        %v473 = vpop.permute.xlu0 %472
        %476 = vset.pattern.permute.xlu0 0
        %477 = vperm.xlu0 %476, %v455
        %v478 = vpop.permute.xlu0 %477
        %481 = vset.pattern.permute.xlu0 0
        %482 = vperm.xlu0 %481, %v456
        %v483 = vpop.permute.xlu0 %482
        %486 = vset.pattern.permute.xlu0 0
        %487 = vperm.xlu0 %486, %v457
        %v488 = vpop.permute.xlu0 %487
        %491 = vset.pattern.permute.xlu0 0
        %492 = vperm.xlu0 %491, %v458
        %v493 = vpop.permute.xlu0 %492
        %496 = vset.pattern.permute.xlu0 0
        %497 = vperm.xlu0 %496, %v459
        %v498 = vpop.permute.xlu0 %497
        %501 = vset.pattern.permute.xlu0 0
        %502 = vperm.xlu0 %501, %v460
        %v503 = vpop.permute.xlu0 %502
        %506 = vset.pattern.permute.xlu0 0
        %507 = vperm.xlu0 %506, %v461
        %v508 = vpop.permute.xlu0 %507
        %511 = vset.pattern.permute.xlu0 0
        %512 = vperm.xlu0 %511, %v462
        %v513 = vpop.permute.xlu0 %512
        %516 = vset.pattern.permute.xlu0 0
        %517 = vperm.xlu0 %516, %v463
        %v518 = vpop.permute.xlu0 %517
        %521 = vset.pattern.permute.xlu0 0
        %522 = vperm.xlu0 %521, %v464
        %v523 = vpop.permute.xlu0 %522
        %526 = vset.pattern.permute.xlu0 0
        %527 = vperm.xlu0 %526, %v465
        %v528 = vpop.permute.xlu0 %527
        %531 = vset.pattern.permute.xlu0 0
        %532 = vperm.xlu0 %531, %v466
        %v533 = vpop.permute.xlu0 %532
        %536 = vset.pattern.permute.xlu0 0
        %537 = vperm.xlu0 %536, %v467
        %v538 = vpop.permute.xlu0 %537
        %541 = vset.pattern.permute.xlu0 0
        %542 = vperm.xlu0 %541, %v468
        %v543 = vpop.permute.xlu0 %542
        %546 = vset.pattern.permute.xlu0 0
        %547 = vperm.xlu0 %546, %v469
        %v548 = vpop.permute.xlu0 %547
        %vm550 = vcmask 64512
        %v552 = vsel %vm550, %v438, 0
        %v555 = vsel %vm550, %v439, 0
        %v558 = vsel %vm550, %v440, 0
        %v561 = vsel %vm550, %v441, 0
        %v564 = vsel %vm550, %v442, 0
        %v567 = vsel %vm550, %v443, 0
        %v570 = vsel %vm550, %v444, 0
        %v573 = vsel %vm550, %v445, 0
        %v576 = vsel %vm550, %v446, 0
        %v579 = vsel %vm550, %v447, 0
        %v582 = vsel %vm550, %v448, 0
        %v585 = vsel %vm550, %v449, 0
        %v588 = vsel %vm550, %v450, 0
        %v591 = vsel %vm550, %v451, 0
        %v594 = vsel %vm550, %v452, 0
        %v597 = vsel %vm550, %v453, 0
        %599 = vmatprep.subr.mxu0 0.0
        %600 = vmatpush1.msra.mxu0 %v437
        %601 = vmatprep.subr.mxu0 0.0
        %602 = vmatpush1.msra.mxu0 0.0
        %603 = vmatprep.subr.mxu0 0.0
        %604 = vmatpush1.msra.mxu0 0.0
        %605 = vmatprep.subr.mxu0 0.0
        %606 = vmatpush1.msra.mxu0 0.0
        %607 = vmatprep.subr.mxu0 0.0
        %608 = vmatpush1.msra.mxu0 0.0
        %609 = vmatprep.subr.mxu0 0.0
        %610 = vmatpush1.msra.mxu0 0.0
        %611 = vmatprep.subr.mxu0 0.0
        %612 = vmatpush1.msra.mxu0 0.0
        %613 = vmatprep.subr.mxu0 0.0
        %614 = vmatpush1.msra.mxu0 0.0
        %615 = vmatprep.subr.mxu0 0.0
        %616 = vmatpush1.msra.mxu0 0.0
        %617 = vmatprep.subr.mxu0 0.0
        %618 = vmatpush1.msra.mxu0 0.0
        %619 = vmatprep.subr.mxu0 0.0
        %620 = vmatpush1.msra.mxu0 0.0
        %621 = vmatprep.subr.mxu0 0.0
        %622 = vmatpush1.msra.mxu0 0.0
        %623 = vmatprep.subr.mxu0 0.0
        %624 = vmatpush1.msra.mxu0 0.0
        %625 = vmatprep.subr.mxu0 0.0
        %626 = vmatpush1.msra.mxu0 0.0
        %627 = vmatprep.subr.mxu0 0.0
        %628 = vmatpush1.msra.mxu0 0.0
        %629 = vmatprep.subr.mxu0 0.0
        %630 = vmatpush1.msra.mxu0 0.0
        %631 = vmatprep.subr.mxu0 0.0
        %632 = vmatpush1.msra.mxu0 0.0
        %633 = vmatprep.subr.mxu0 0.0
        %634 = vmatpush1.msra.mxu0 0.0
        %635 = vmatprep.subr.mxu0 0.0
        %636 = vmatpush1.msra.mxu0 0.0
        %637 = vmatprep.subr.mxu0 0.0
        %638 = vmatpush1.msra.mxu0 0.0
        %639 = vmatprep.subr.mxu0 0.0
        %640 = vmatpush1.msra.mxu0 0.0
        %641 = vmatprep.subr.mxu0 0.0
        %642 = vmatpush1.msra.mxu0 0.0
        %643 = vmatprep.subr.mxu0 0.0
        %644 = vmatpush1.msra.mxu0 0.0
        %645 = vmatprep.subr.mxu0 0.0
        %646 = vmatpush1.msra.mxu0 0.0
        %647 = vmatprep.subr.mxu0 0.0
        %648 = vmatpush1.msra.mxu0 0.0
        %649 = vmatprep.subr.mxu0 0.0
        %650 = vmatpush1.msra.mxu0 0.0
        %651 = vmatprep.subr.mxu0 0.0
        %652 = vmatpush1.msra.mxu0 0.0
        %653 = vmatprep.subr.mxu0 0.0
        %654 = vmatpush1.msra.mxu0 0.0
        %655 = vmatprep.subr.mxu0 0.0
        %656 = vmatpush1.msra.mxu0 0.0
        %657 = vmatprep.subr.mxu0 0.0
        %658 = vmatpush1.msra.mxu0 0.0
        %659 = vmatprep.subr.mxu0 0.0
        %660 = vmatpush1.msra.mxu0 0.0
        %661 = vmatprep.subr.mxu0 0.0
        %662 = vmatpush1.msra.mxu0 0.0
        %663 = vmatprep.mubr.f32.mxu0 0.0
        %664 = vmatmul.mubr.f32.gmra.mrb[0].mxu0 %v552
        %v665 = vpop.f32.mrb[0].mxu0
        %v666 = vadd.f32 %v473, %v665
        %v667 = vpop.f32.mrb[0].mxu0
        %668 = vmatprep.mubr.f32.mxu0 0.0
        %669 = vmatmul.mubr.f32.gmra.mrb[0].mxu0 %v555
        %v670 = vpop.f32.mrb[0].mxu0
        %v671 = vadd.f32 %v478, %v670
        %v672 = vpop.f32.mrb[0].mxu0
        %673 = vmatprep.mubr.f32.mxu0 0.0
        %674 = vmatmul.mubr.f32.gmra.mrb[0].mxu0 %v558
        %v675 = vpop.f32.mrb[0].mxu0
        %v676 = vadd.f32 %v483, %v675
        %v677 = vpop.f32.mrb[0].mxu0
        %678 = vmatprep.mubr.f32.mxu0 0.0
        %679 = vmatmul.mubr.f32.gmra.mrb[0].mxu0 %v561
        %v680 = vpop.f32.mrb[0].mxu0
        %v681 = vadd.f32 %v488, %v680
        %v682 = vpop.f32.mrb[0].mxu0
        %683 = vmatprep.mubr.f32.mxu0 0.0
        %684 = vmatmul.mubr.f32.gmra.mrb[0].mxu0 %v564
        %v685 = vpop.f32.mrb[0].mxu0
        %v686 = vadd.f32 %v493, %v685
        %v687 = vpop.f32.mrb[0].mxu0
        %688 = vmatprep.mubr.f32.mxu0 0.0
        %689 = vmatmul.mubr.f32.gmra.mrb[0].mxu0 %v567
        %v690 = vpop.f32.mrb[0].mxu0
        %v691 = vadd.f32 %v498, %v690
        %v692 = vpop.f32.mrb[0].mxu0
        %693 = vmatprep.mubr.f32.mxu0 0.0
        %694 = vmatmul.mubr.f32.gmra.mrb[0].mxu0 %v570
        %v695 = vpop.f32.mrb[0].mxu0
        %v696 = vadd.f32 %v503, %v695
        %v697 = vpop.f32.mrb[0].mxu0
        %698 = vmatprep.mubr.f32.mxu0 0.0
        %699 = vmatmul.mubr.f32.gmra.mrb[0].mxu0 %v573
        %v700 = vpop.f32.mrb[0].mxu0
        %v701 = vadd.f32 %v508, %v700
        %v702 = vpop.f32.mrb[0].mxu0
        %703 = vmatprep.mubr.f32.mxu0 0.0
        %704 = vmatmul.mubr.f32.gmra.mrb[0].mxu0 %v576
        %v705 = vpop.f32.mrb[0].mxu0
        %v706 = vadd.f32 %v513, %v705
        %v707 = vpop.f32.mrb[0].mxu0
        %708 = vmatprep.mubr.f32.mxu0 0.0
        %709 = vmatmul.mubr.f32.gmra.mrb[0].mxu0 %v579
        %v710 = vpop.f32.mrb[0].mxu0
        %v711 = vadd.f32 %v518, %v710
        %v712 = vpop.f32.mrb[0].mxu0
        %713 = vmatprep.mubr.f32.mxu0 0.0
        %714 = vmatmul.mubr.f32.gmra.mrb[0].mxu0 %v582
        %v715 = vpop.f32.mrb[0].mxu0
        %v716 = vadd.f32 %v523, %v715
        %v717 = vpop.f32.mrb[0].mxu0
        %718 = vmatprep.mubr.f32.mxu0 0.0
        %719 = vmatmul.mubr.f32.gmra.mrb[0].mxu0 %v585
        %v720 = vpop.f32.mrb[0].mxu0
        %v721 = vadd.f32 %v528, %v720
        %v722 = vpop.f32.mrb[0].mxu0
        %723 = vmatprep.mubr.f32.mxu0 0.0
        %724 = vmatmul.mubr.f32.gmra.mrb[0].mxu0 %v588
        %v725 = vpop.f32.mrb[0].mxu0
        %v726 = vadd.f32 %v533, %v725
        %v727 = vpop.f32.mrb[0].mxu0
        %728 = vmatprep.mubr.f32.mxu0 0.0
        %729 = vmatmul.mubr.f32.gmra.mrb[0].mxu0 %v591
        %v730 = vpop.f32.mrb[0].mxu0
        %v731 = vadd.f32 %v538, %v730
        %v732 = vpop.f32.mrb[0].mxu0
        %733 = vmatprep.mubr.f32.mxu0 0.0
        %734 = vmatmul.mubr.f32.gmra.mrb[0].mxu0 %v594
        %v735 = vpop.f32.mrb[0].mxu0
        %v736 = vadd.f32 %v543, %v735
        %v737 = vpop.f32.mrb[0].mxu0
        %738 = vmatprep.mubr.f32.mxu0 0.0
        %739 = vmatmul.mubr.f32.gmra.mrb[0].mxu0 %v597
        %v740 = vpop.f32.mrb[0].mxu0
        %v741 = vadd.f32 %v548, %v740
        %v742 = vpop.f32.mrb[0].mxu0
        %743 = vdwg.mxu0
        %v744 = vtanh.pop %v666
        %v745 = vtanh.pop %v671
        %v746 = vtanh.pop %v676
        %v747 = vtanh.pop %v681
        %v748 = vtanh.pop %v686
        %v749 = vtanh.pop %v691
        %v750 = vtanh.pop %v696
        %v751 = vtanh.pop %v701
        %v752 = vtanh.pop %v706
        %v753 = vtanh.pop %v711
        %v754 = vtanh.pop %v716
        %v755 = vtanh.pop %v721
        %v756 = vtanh.pop %v726
        %v757 = vtanh.pop %v731
        %v758 = vtanh.pop %v736
        %v759 = vtanh.pop %v741
        %v760 = vpack.c.bf16 %v745, %v744
        %v761 = vpack.c.bf16 %v747, %v746
        %v762 = vpack.c.bf16 %v749, %v748
        %v763 = vpack.c.bf16 %v751, %v750
        %v764 = vpack.c.bf16 %v753, %v752
        %v765 = vpack.c.bf16 %v755, %v754
        %v766 = vpack.c.bf16 %v757, %v756
        %v767 = vpack.c.bf16 %v759, %v758
        %v768 = vld [vmem:[%s3] sm:$0xf]
        %v769 = vld [vmem:[%s3 + $0x4] sm:$0xf]
        %v770 = vld [vmem:[%s3 + $0x8] sm:$0xf]
        %v771 = vld [vmem:[%s3 + $0xc] sm:$0xf]
        %v772 = vld [vmem:[%s3 + $0x10] sm:$0xf]
        %v773 = vld [vmem:[%s3 + $0x14] sm:$0xf]
        %v774 = vld [vmem:[%s3 + $0x18] sm:$0xf]
        %v775 = vld [vmem:[%s3 + $0x1c] sm:$0xf]
        %v776 = vld [vmem:[%s3 + $0x20] sm:$0xf]
        %v777 = vld [vmem:[%s3 + $0x24] sm:$0xf]
        %v778 = vld [vmem:[%s3 + $0x28] sm:$0xf]
        %v779 = vld [vmem:[%s3 + $0x2c] sm:$0xf]
        %v780 = vld [vmem:[%s3 + $0x30] sm:$0xf]
        %v781 = vld [vmem:[%s3 + $0x34] sm:$0xf]
        %v782 = vld [vmem:[%s3 + $0x38] sm:$0xf]
        %v783 = vld [vmem:[%s3 + $0x3c] sm:$0xf]
        %v784 = vld [vmem:[%s4] sm:$0xff]
        %v785 = vld [vmem:[%s4 + $0x8] sm:$0xff]
        %v786 = vld [vmem:[%s4 + $0x10] sm:$0xff]
        %v787 = vld [vmem:[%s4 + $0x18] sm:$0xff]
        %v788 = vld [vmem:[%s4 + $0x20] sm:$0xff]
        %v789 = vld [vmem:[%s4 + $0x28] sm:$0xff]
        %v790 = vld [vmem:[%s4 + $0x30] sm:$0xff]
        %v791 = vld [vmem:[%s4 + $0x38] sm:$0xff]
        %v792 = vld [vmem:[%s4 + $0x40] sm:$0xff]
        %v793 = vld [vmem:[%s4 + $0x48] sm:$0xff]
        %v794 = vld [vmem:[%s4 + $0x50] sm:$0xff]
        %v795 = vld [vmem:[%s4 + $0x58] sm:$0xff]
        %v796 = vld [vmem:[%s4 + $0x60] sm:$0xff]
        %v797 = vld [vmem:[%s4 + $0x68] sm:$0xff]
        %v798 = vld [vmem:[%s4 + $0x70] sm:$0xff]
        %v799 = vld [vmem:[%s4 + $0x78] sm:$0xff]
        %801 = vset.pattern.permute.xlu0 0
        %802 = vperm.xlu0 %801, %v784
        %v803 = vpop.permute.xlu0 %802
        %806 = vset.pattern.permute.xlu0 0
        %807 = vperm.xlu0 %806, %v785
        %v808 = vpop.permute.xlu0 %807
        %811 = vset.pattern.permute.xlu0 0
        %812 = vperm.xlu0 %811, %v786
        %v813 = vpop.permute.xlu0 %812
        %816 = vset.pattern.permute.xlu0 0
        %817 = vperm.xlu0 %816, %v787
        %v818 = vpop.permute.xlu0 %817
        %821 = vset.pattern.permute.xlu0 0
        %822 = vperm.xlu0 %821, %v788
        %v823 = vpop.permute.xlu0 %822
        %826 = vset.pattern.permute.xlu0 0
        %827 = vperm.xlu0 %826, %v789
        %v828 = vpop.permute.xlu0 %827
        %831 = vset.pattern.permute.xlu0 0
        %832 = vperm.xlu0 %831, %v790
        %v833 = vpop.permute.xlu0 %832
        %836 = vset.pattern.permute.xlu0 0
        %837 = vperm.xlu0 %836, %v791
        %v838 = vpop.permute.xlu0 %837
        %841 = vset.pattern.permute.xlu0 0
        %842 = vperm.xlu0 %841, %v792
        %v843 = vpop.permute.xlu0 %842
        %846 = vset.pattern.permute.xlu0 0
        %847 = vperm.xlu0 %846, %v793
        %v848 = vpop.permute.xlu0 %847
        %851 = vset.pattern.permute.xlu0 0
        %852 = vperm.xlu0 %851, %v794
        %v853 = vpop.permute.xlu0 %852
        %856 = vset.pattern.permute.xlu0 0
        %857 = vperm.xlu0 %856, %v795
        %v858 = vpop.permute.xlu0 %857
        %861 = vset.pattern.permute.xlu0 0
        %862 = vperm.xlu0 %861, %v796
        %v863 = vpop.permute.xlu0 %862
        %866 = vset.pattern.permute.xlu0 0
        %867 = vperm.xlu0 %866, %v797
        %v868 = vpop.permute.xlu0 %867
        %871 = vset.pattern.permute.xlu0 0
        %872 = vperm.xlu0 %871, %v798
        %v873 = vpop.permute.xlu0 %872
        %876 = vset.pattern.permute.xlu0 0
        %877 = vperm.xlu0 %876, %v799
        %v878 = vpop.permute.xlu0 %877
        %v896 = vunpack.c.l.b16 %v768
        %v897 = vunpack.c.l.b16 %v769
        %v898 = vunpack.c.l.b16 %v770
        %v899 = vunpack.c.l.b16 %v771
        %v900 = vunpack.c.l.b16 %v772
        %v901 = vunpack.c.l.b16 %v773
        %v902 = vunpack.c.l.b16 %v774
        %v903 = vunpack.c.l.b16 %v775
        %v904 = vunpack.c.l.b16 %v776
        %v905 = vunpack.c.l.b16 %v777
        %v906 = vunpack.c.l.b16 %v778
        %v907 = vunpack.c.l.b16 %v779
        %v908 = vunpack.c.l.b16 %v780
        %v909 = vunpack.c.l.b16 %v781
        %v910 = vunpack.c.l.b16 %v782
        %v911 = vunpack.c.l.b16 %v783
        %v912 = vpack.c.b16 %v897, %v896
        %v913 = vpack.c.b16 %v899, %v898
        %v914 = vpack.c.b16 %v901, %v900
        %v915 = vpack.c.b16 %v903, %v902
        %v916 = vpack.c.b16 %v905, %v904
        %v917 = vpack.c.b16 %v907, %v906
        %v918 = vpack.c.b16 %v909, %v908
        %v919 = vpack.c.b16 %v911, %v910
        %928 = vmatprep.subr.bf16.mxu0 0
        %929 = vmatpush1.bf16.msra.mxu0 %v760
        %930 = vmatprep.subr.bf16.mxu0 0
        %931 = vmatpush1.bf16.msra.mxu0 %v761
        %932 = vmatprep.subr.bf16.mxu0 0
        %933 = vmatpush1.bf16.msra.mxu0 %v762
        %934 = vmatprep.subr.bf16.mxu0 0
        %935 = vmatpush1.bf16.msra.mxu0 %v763
        %936 = vmatprep.subr.bf16.mxu0 0
        %937 = vmatpush1.bf16.msra.mxu0 %v764
        %938 = vmatprep.subr.bf16.mxu0 0
        %939 = vmatpush1.bf16.msra.mxu0 %v765
        %940 = vmatprep.subr.bf16.mxu0 0
        %941 = vmatpush1.bf16.msra.mxu0 %v766
        %942 = vmatprep.subr.bf16.mxu0 0
        %943 = vmatpush1.bf16.msra.mxu0 %v767
        %944 = vmatprep.subr.bf16.mxu0 0
        %945 = vmatpush1.bf16.msra.mxu0 0
        %946 = vmatprep.subr.bf16.mxu0 0
        %947 = vmatpush1.bf16.msra.mxu0 0
        %948 = vmatprep.subr.bf16.mxu0 0
        %949 = vmatpush1.bf16.msra.mxu0 0
        %950 = vmatprep.subr.bf16.mxu0 0
        %951 = vmatpush1.bf16.msra.mxu0 0
        %952 = vmatprep.subr.bf16.mxu0 0
        %953 = vmatpush1.bf16.msra.mxu0 0
        %954 = vmatprep.subr.bf16.mxu0 0
        %955 = vmatpush1.bf16.msra.mxu0 0
        %956 = vmatprep.subr.bf16.mxu0 0
        %957 = vmatpush1.bf16.msra.mxu0 0
        %958 = vmatprep.subr.bf16.mxu0 0
        %959 = vmatpush1.bf16.msra.mxu0 0
        %960 = vmatprep.mubr.bf16.mxu0 0
        %961 = vmatmul.mubr.bf16.gmra.mrb[0].mxu0 %v912
        %v962 = vpop.f32.mrb[0].mxu0
        %v963 = vadd.f32 %v803, %v962
        %v964 = vpop.f32.mrb[0].mxu0
        %v965 = vpop.f32.mrb[0].mxu0
        %v966 = vadd.f32 %v808, %v965
        %v967 = vpop.f32.mrb[0].mxu0
        %968 = vmatprep.mubr.bf16.mxu0 0
        %969 = vmatmul.mubr.bf16.gmra.mrb[0].mxu0 %v913
        %v970 = vpop.f32.mrb[0].mxu0
        %v971 = vadd.f32 %v813, %v970
        %v972 = vpop.f32.mrb[0].mxu0
        %v973 = vpop.f32.mrb[0].mxu0
        %v974 = vadd.f32 %v818, %v973
        %v975 = vpop.f32.mrb[0].mxu0
        %976 = vmatprep.mubr.bf16.mxu0 0
        %977 = vmatmul.mubr.bf16.gmra.mrb[0].mxu0 %v914
        %v978 = vpop.f32.mrb[0].mxu0
        %v979 = vadd.f32 %v823, %v978
        %v980 = vpop.f32.mrb[0].mxu0
        %v981 = vpop.f32.mrb[0].mxu0
        %v982 = vadd.f32 %v828, %v981
        %v983 = vpop.f32.mrb[0].mxu0
        %984 = vmatprep.mubr.bf16.mxu0 0
        %985 = vmatmul.mubr.bf16.gmra.mrb[0].mxu0 %v915
        %v986 = vpop.f32.mrb[0].mxu0
        %v987 = vadd.f32 %v833, %v986
        %v988 = vpop.f32.mrb[0].mxu0
        %v989 = vpop.f32.mrb[0].mxu0
        %v990 = vadd.f32 %v838, %v989
        %v991 = vpop.f32.mrb[0].mxu0
        %992 = vmatprep.mubr.bf16.mxu0 0
        %993 = vmatmul.mubr.bf16.gmra.mrb[0].mxu0 %v916
        %v994 = vpop.f32.mrb[0].mxu0
        %v995 = vadd.f32 %v843, %v994
        %v996 = vpop.f32.mrb[0].mxu0
        %v997 = vpop.f32.mrb[0].mxu0
        %v998 = vadd.f32 %v848, %v997
        %v999 = vpop.f32.mrb[0].mxu0
        %1000 = vmatprep.mubr.bf16.mxu0 0
        %1001 = vmatmul.mubr.bf16.gmra.mrb[0].mxu0 %v917
        %v1002 = vpop.f32.mrb[0].mxu0
        %v1003 = vadd.f32 %v853, %v1002
        %v1004 = vpop.f32.mrb[0].mxu0
        %v1005 = vpop.f32.mrb[0].mxu0
        %v1006 = vadd.f32 %v858, %v1005
        %v1007 = vpop.f32.mrb[0].mxu0
        %1008 = vmatprep.mubr.bf16.mxu0 0
        %1009 = vmatmul.mubr.bf16.gmra.mrb[0].mxu0 %v918
        %v1010 = vpop.f32.mrb[0].mxu0
        %v1011 = vadd.f32 %v863, %v1010
        %v1012 = vpop.f32.mrb[0].mxu0
        %v1013 = vpop.f32.mrb[0].mxu0
        %v1014 = vadd.f32 %v868, %v1013
        %v1015 = vpop.f32.mrb[0].mxu0
        %1016 = vmatprep.mubr.bf16.mxu0 0
        %1017 = vmatmul.mubr.bf16.gmra.mrb[0].mxu0 %v919
        %v1018 = vpop.f32.mrb[0].mxu0
        %v1019 = vadd.f32 %v873, %v1018
        %v1020 = vpop.f32.mrb[0].mxu0
        %v1021 = vpop.f32.mrb[0].mxu0
        %v1022 = vadd.f32 %v878, %v1021
        %v1023 = vpop.f32.mrb[0].mxu0
        %1024 = vdwg.mxu0
        %v1025 = vtanh.pop %v963
        %v1026 = vtanh.pop %v966
        %v1027 = vtanh.pop %v971
        %v1028 = vtanh.pop %v974
        %v1029 = vtanh.pop %v979
        %v1030 = vtanh.pop %v982
        %v1031 = vtanh.pop %v987
        %v1032 = vtanh.pop %v990
        %v1033 = vtanh.pop %v995
        %v1034 = vtanh.pop %v998
        %v1035 = vtanh.pop %v1003
        %v1036 = vtanh.pop %v1006
        %v1037 = vtanh.pop %v1011
        %v1038 = vtanh.pop %v1014
        %v1039 = vtanh.pop %v1019
        %v1040 = vtanh.pop %v1022
        %v1041 = vpack.c.bf16 %v1026, %v1025
        %v1042 = vpack.c.bf16 %v1028, %v1027
        %v1043 = vpack.c.bf16 %v1030, %v1029
        %v1044 = vpack.c.bf16 %v1032, %v1031
        %v1045 = vpack.c.bf16 %v1034, %v1033
        %v1046 = vpack.c.bf16 %v1036, %v1035
        %v1047 = vpack.c.bf16 %v1038, %v1037
        %v1048 = vpack.c.bf16 %v1040, %v1039
        %v1049 = vld [vmem:[%s5] sm:$0xf]
        %v1050 = vld [vmem:[%s5 + $0x4] sm:$0xf]
        %v1051 = vld [vmem:[%s5 + $0x8] sm:$0xf]
        %v1052 = vld [vmem:[%s5 + $0xc] sm:$0xf]
        %v1053 = vld [vmem:[%s5 + $0x10] sm:$0xf]
        %v1054 = vld [vmem:[%s5 + $0x14] sm:$0xf]
        %v1055 = vld [vmem:[%s5 + $0x18] sm:$0xf]
        %v1056 = vld [vmem:[%s5 + $0x1c] sm:$0xf]
        %v1057 = vld [vmem:[%s5 + $0x20] sm:$0xf]
        %v1058 = vld [vmem:[%s5 + $0x24] sm:$0xf]
        %v1059 = vld [vmem:[%s5 + $0x28] sm:$0xf]
        %v1060 = vld [vmem:[%s5 + $0x2c] sm:$0xf]
        %v1061 = vld [vmem:[%s5 + $0x30] sm:$0xf]
        %v1062 = vld [vmem:[%s5 + $0x34] sm:$0xf]
        %v1063 = vld [vmem:[%s5 + $0x38] sm:$0xf]
        %v1064 = vld [vmem:[%s5 + $0x3c] sm:$0xf]
        %v1065 = vld [vmem:[%s6] sm:$0xff]
        %v1066 = vld [vmem:[%s6 + $0x8] sm:$0xff]
        %v1067 = vld [vmem:[%s6 + $0x10] sm:$0xff]
        %v1068 = vld [vmem:[%s6 + $0x18] sm:$0xff]
        %v1069 = vld [vmem:[%s6 + $0x20] sm:$0xff]
        %v1070 = vld [vmem:[%s6 + $0x28] sm:$0xff]
        %v1071 = vld [vmem:[%s6 + $0x30] sm:$0xff]
        %v1072 = vld [vmem:[%s6 + $0x38] sm:$0xff]
        %v1073 = vld [vmem:[%s6 + $0x40] sm:$0xff]
        %v1074 = vld [vmem:[%s6 + $0x48] sm:$0xff]
        %v1075 = vld [vmem:[%s6 + $0x50] sm:$0xff]
        %v1076 = vld [vmem:[%s6 + $0x58] sm:$0xff]
        %v1077 = vld [vmem:[%s6 + $0x60] sm:$0xff]
        %v1078 = vld [vmem:[%s6 + $0x68] sm:$0xff]
        %v1079 = vld [vmem:[%s6 + $0x70] sm:$0xff]
        %v1080 = vld [vmem:[%s6 + $0x78] sm:$0xff]
        %1082 = vset.pattern.permute.xlu0 0
        %1083 = vperm.xlu0 %1082, %v1065
        %v1084 = vpop.permute.xlu0 %1083
        %1087 = vset.pattern.permute.xlu0 0
        %1088 = vperm.xlu0 %1087, %v1066
        %v1089 = vpop.permute.xlu0 %1088
        %1092 = vset.pattern.permute.xlu0 0
        %1093 = vperm.xlu0 %1092, %v1067
        %v1094 = vpop.permute.xlu0 %1093
        %1097 = vset.pattern.permute.xlu0 0
        %1098 = vperm.xlu0 %1097, %v1068
        %v1099 = vpop.permute.xlu0 %1098
        %1102 = vset.pattern.permute.xlu0 0
        %1103 = vperm.xlu0 %1102, %v1069
        %v1104 = vpop.permute.xlu0 %1103
        %1107 = vset.pattern.permute.xlu0 0
        %1108 = vperm.xlu0 %1107, %v1070
        %v1109 = vpop.permute.xlu0 %1108
        %1112 = vset.pattern.permute.xlu0 0
        %1113 = vperm.xlu0 %1112, %v1071
        %v1114 = vpop.permute.xlu0 %1113
        %1117 = vset.pattern.permute.xlu0 0
        %1118 = vperm.xlu0 %1117, %v1072
        %v1119 = vpop.permute.xlu0 %1118
        %1122 = vset.pattern.permute.xlu0 0
        %1123 = vperm.xlu0 %1122, %v1073
        %v1124 = vpop.permute.xlu0 %1123
        %1127 = vset.pattern.permute.xlu0 0
        %1128 = vperm.xlu0 %1127, %v1074
        %v1129 = vpop.permute.xlu0 %1128
        %1132 = vset.pattern.permute.xlu0 0
        %1133 = vperm.xlu0 %1132, %v1075
        %v1134 = vpop.permute.xlu0 %1133
        %1137 = vset.pattern.permute.xlu0 0
        %1138 = vperm.xlu0 %1137, %v1076
        %v1139 = vpop.permute.xlu0 %1138
        %1142 = vset.pattern.permute.xlu0 0
        %1143 = vperm.xlu0 %1142, %v1077
        %v1144 = vpop.permute.xlu0 %1143
        %1147 = vset.pattern.permute.xlu0 0
        %1148 = vperm.xlu0 %1147, %v1078
        %v1149 = vpop.permute.xlu0 %1148
        %1152 = vset.pattern.permute.xlu0 0
        %1153 = vperm.xlu0 %1152, %v1079
        %v1154 = vpop.permute.xlu0 %1153
        %1157 = vset.pattern.permute.xlu0 0
        %1158 = vperm.xlu0 %1157, %v1080
        %v1159 = vpop.permute.xlu0 %1158
        %v1177 = vunpack.c.l.b16 %v1049
        %v1178 = vunpack.c.l.b16 %v1050
        %v1179 = vunpack.c.l.b16 %v1051
        %v1180 = vunpack.c.l.b16 %v1052
        %v1181 = vunpack.c.l.b16 %v1053
        %v1182 = vunpack.c.l.b16 %v1054
        %v1183 = vunpack.c.l.b16 %v1055
        %v1184 = vunpack.c.l.b16 %v1056
        %v1185 = vunpack.c.l.b16 %v1057
        %v1186 = vunpack.c.l.b16 %v1058
        %v1187 = vunpack.c.l.b16 %v1059
        %v1188 = vunpack.c.l.b16 %v1060
        %v1189 = vunpack.c.l.b16 %v1061
        %v1190 = vunpack.c.l.b16 %v1062
        %v1191 = vunpack.c.l.b16 %v1063
        %v1192 = vunpack.c.l.b16 %v1064
        %v1193 = vpack.c.b16 %v1178, %v1177
        %v1194 = vpack.c.b16 %v1180, %v1179
        %v1195 = vpack.c.b16 %v1182, %v1181
        %v1196 = vpack.c.b16 %v1184, %v1183
        %v1197 = vpack.c.b16 %v1186, %v1185
        %v1198 = vpack.c.b16 %v1188, %v1187
        %v1199 = vpack.c.b16 %v1190, %v1189
        %v1200 = vpack.c.b16 %v1192, %v1191
        %1209 = vmatprep.subr.bf16.mxu0 0
        %1210 = vmatpush1.bf16.msra.mxu0 %v1041
        %1211 = vmatprep.subr.bf16.mxu0 0
        %1212 = vmatpush1.bf16.msra.mxu0 %v1042
        %1213 = vmatprep.subr.bf16.mxu0 0
        %1214 = vmatpush1.bf16.msra.mxu0 %v1043
        %1215 = vmatprep.subr.bf16.mxu0 0
        %1216 = vmatpush1.bf16.msra.mxu0 %v1044
        %1217 = vmatprep.subr.bf16.mxu0 0
        %1218 = vmatpush1.bf16.msra.mxu0 %v1045
        %1219 = vmatprep.subr.bf16.mxu0 0
        %1220 = vmatpush1.bf16.msra.mxu0 %v1046
        %1221 = vmatprep.subr.bf16.mxu0 0
        %1222 = vmatpush1.bf16.msra.mxu0 %v1047
        %1223 = vmatprep.subr.bf16.mxu0 0
        %1224 = vmatpush1.bf16.msra.mxu0 %v1048
        %1225 = vmatprep.subr.bf16.mxu0 0
        %1226 = vmatpush1.bf16.msra.mxu0 0
        %1227 = vmatprep.subr.bf16.mxu0 0
        %1228 = vmatpush1.bf16.msra.mxu0 0
        %1229 = vmatprep.subr.bf16.mxu0 0
        %1230 = vmatpush1.bf16.msra.mxu0 0
        %1231 = vmatprep.subr.bf16.mxu0 0
        %1232 = vmatpush1.bf16.msra.mxu0 0
        %1233 = vmatprep.subr.bf16.mxu0 0
        %1234 = vmatpush1.bf16.msra.mxu0 0
        %1235 = vmatprep.subr.bf16.mxu0 0
        %1236 = vmatpush1.bf16.msra.mxu0 0
        %1237 = vmatprep.subr.bf16.mxu0 0
        %1238 = vmatpush1.bf16.msra.mxu0 0
        %1239 = vmatprep.subr.bf16.mxu0 0
        %1240 = vmatpush1.bf16.msra.mxu0 0
        %1241 = vmatprep.mubr.bf16.mxu0 0
        %1242 = vmatmul.mubr.bf16.gmra.mrb[0].mxu0 %v1193
        %v1243 = vpop.f32.mrb[0].mxu0
        %v1244 = vadd.f32 %v1084, %v1243
        %v1245 = vpop.f32.mrb[0].mxu0
        %v1246 = vpop.f32.mrb[0].mxu0
        %v1247 = vadd.f32 %v1089, %v1246
        %v1248 = vpop.f32.mrb[0].mxu0
        %1249 = vmatprep.mubr.bf16.mxu0 0
        %1250 = vmatmul.mubr.bf16.gmra.mrb[0].mxu0 %v1194
        %v1251 = vpop.f32.mrb[0].mxu0
        %v1252 = vadd.f32 %v1094, %v1251
        %v1253 = vpop.f32.mrb[0].mxu0
        %v1254 = vpop.f32.mrb[0].mxu0
        %v1255 = vadd.f32 %v1099, %v1254
        %v1256 = vpop.f32.mrb[0].mxu0
        %1257 = vmatprep.mubr.bf16.mxu0 0
        %1258 = vmatmul.mubr.bf16.gmra.mrb[0].mxu0 %v1195
        %v1259 = vpop.f32.mrb[0].mxu0
        %v1260 = vadd.f32 %v1104, %v1259
        %v1261 = vpop.f32.mrb[0].mxu0
        %v1262 = vpop.f32.mrb[0].mxu0
        %v1263 = vadd.f32 %v1109, %v1262
        %v1264 = vpop.f32.mrb[0].mxu0
        %1265 = vmatprep.mubr.bf16.mxu0 0
        %1266 = vmatmul.mubr.bf16.gmra.mrb[0].mxu0 %v1196
        %v1267 = vpop.f32.mrb[0].mxu0
        %v1268 = vadd.f32 %v1114, %v1267
        %v1269 = vpop.f32.mrb[0].mxu0
        %v1270 = vpop.f32.mrb[0].mxu0
        %v1271 = vadd.f32 %v1119, %v1270
        %v1272 = vpop.f32.mrb[0].mxu0
        %1273 = vmatprep.mubr.bf16.mxu0 0
        %1274 = vmatmul.mubr.bf16.gmra.mrb[0].mxu0 %v1197
        %v1275 = vpop.f32.mrb[0].mxu0
        %v1276 = vadd.f32 %v1124, %v1275
        %v1277 = vpop.f32.mrb[0].mxu0
        %v1278 = vpop.f32.mrb[0].mxu0
        %v1279 = vadd.f32 %v1129, %v1278
        %v1280 = vpop.f32.mrb[0].mxu0
        %1281 = vmatprep.mubr.bf16.mxu0 0
        %1282 = vmatmul.mubr.bf16.gmra.mrb[0].mxu0 %v1198
        %v1283 = vpop.f32.mrb[0].mxu0
        %v1284 = vadd.f32 %v1134, %v1283
        %v1285 = vpop.f32.mrb[0].mxu0
        %v1286 = vpop.f32.mrb[0].mxu0
        %v1287 = vadd.f32 %v1139, %v1286
        %v1288 = vpop.f32.mrb[0].mxu0
        %1289 = vmatprep.mubr.bf16.mxu0 0
        %1290 = vmatmul.mubr.bf16.gmra.mrb[0].mxu0 %v1199
        %v1291 = vpop.f32.mrb[0].mxu0
        %v1292 = vadd.f32 %v1144, %v1291
        %v1293 = vpop.f32.mrb[0].mxu0
        %v1294 = vpop.f32.mrb[0].mxu0
        %v1295 = vadd.f32 %v1149, %v1294
        %v1296 = vpop.f32.mrb[0].mxu0
        %1297 = vmatprep.mubr.bf16.mxu0 0
        %1298 = vmatmul.mubr.bf16.gmra.mrb[0].mxu0 %v1200
        %v1299 = vpop.f32.mrb[0].mxu0
        %v1300 = vadd.f32 %v1154, %v1299
        %v1301 = vpop.f32.mrb[0].mxu0
        %v1302 = vpop.f32.mrb[0].mxu0
        %v1303 = vadd.f32 %v1159, %v1302
        %v1304 = vpop.f32.mrb[0].mxu0
        %1305 = vdwg.mxu0
        %v1306 = vtanh.pop %v1244
        %v1307 = vtanh.pop %v1247
        %v1308 = vtanh.pop %v1252
        %v1309 = vtanh.pop %v1255
        %v1310 = vtanh.pop %v1260
        %v1311 = vtanh.pop %v1263
        %v1312 = vtanh.pop %v1268
        %v1313 = vtanh.pop %v1271
        %v1314 = vtanh.pop %v1276
        %v1315 = vtanh.pop %v1279
        %v1316 = vtanh.pop %v1284
        %v1317 = vtanh.pop %v1287
        %v1318 = vtanh.pop %v1292
        %v1319 = vtanh.pop %v1295
        %v1320 = vtanh.pop %v1300
        %v1321 = vtanh.pop %v1303
        %v1322 = vpack.c.bf16 %v1307, %v1306
        %v1323 = vpack.c.bf16 %v1309, %v1308
        %v1324 = vpack.c.bf16 %v1311, %v1310
        %v1325 = vpack.c.bf16 %v1313, %v1312
        %v1326 = vpack.c.bf16 %v1315, %v1314
        %v1327 = vpack.c.bf16 %v1317, %v1316
        %v1328 = vpack.c.bf16 %v1319, %v1318
        %v1329 = vpack.c.bf16 %v1321, %v1320
        %v1330 = vld [vmem:[%s7] sm:$0xf]
        %v1331 = vld [vmem:[%s7 + $0x4] sm:$0xf]
        %v1332 = vld [vmem:[%s7 + $0x8] sm:$0xf]
        %v1333 = vld [vmem:[%s7 + $0xc] sm:$0xf]
        %v1334 = vld [vmem:[%s7 + $0x10] sm:$0xf]
        %v1335 = vld [vmem:[%s7 + $0x14] sm:$0xf]
        %v1336 = vld [vmem:[%s7 + $0x18] sm:$0xf]
        %v1337 = vld [vmem:[%s7 + $0x1c] sm:$0xf]
        %v1338 = vld [vmem:[%s7 + $0x20] sm:$0xf]
        %v1339 = vld [vmem:[%s7 + $0x24] sm:$0xf]
        %v1340 = vld [vmem:[%s7 + $0x28] sm:$0xf]
        %v1341 = vld [vmem:[%s7 + $0x2c] sm:$0xf]
        %v1342 = vld [vmem:[%s7 + $0x30] sm:$0xf]
        %v1343 = vld [vmem:[%s7 + $0x34] sm:$0xf]
        %v1344 = vld [vmem:[%s7 + $0x38] sm:$0xf]
        %v1345 = vld [vmem:[%s7 + $0x3c] sm:$0xf]
        %v1346 = vld [vmem:[%s8] sm:$0xff]
        %v1347 = vld [vmem:[%s8 + $0x8] sm:$0xff]
        %v1348 = vld [vmem:[%s8 + $0x10] sm:$0xff]
        %v1349 = vld [vmem:[%s8 + $0x18] sm:$0xff]
        %v1350 = vld [vmem:[%s8 + $0x20] sm:$0xff]
        %v1351 = vld [vmem:[%s8 + $0x28] sm:$0xff]
        %v1352 = vld [vmem:[%s8 + $0x30] sm:$0xff]
        %v1353 = vld [vmem:[%s8 + $0x38] sm:$0xff]
        %v1354 = vld [vmem:[%s8 + $0x40] sm:$0xff]
        %v1355 = vld [vmem:[%s8 + $0x48] sm:$0xff]
        %v1356 = vld [vmem:[%s8 + $0x50] sm:$0xff]
        %v1357 = vld [vmem:[%s8 + $0x58] sm:$0xff]
        %v1358 = vld [vmem:[%s8 + $0x60] sm:$0xff]
        %v1359 = vld [vmem:[%s8 + $0x68] sm:$0xff]
        %v1360 = vld [vmem:[%s8 + $0x70] sm:$0xff]
        %v1361 = vld [vmem:[%s8 + $0x78] sm:$0xff]
        %1363 = vset.pattern.permute.xlu0 0
        %1364 = vperm.xlu0 %1363, %v1346
        %v1365 = vpop.permute.xlu0 %1364
        %1368 = vset.pattern.permute.xlu0 0
        %1369 = vperm.xlu0 %1368, %v1347
        %v1370 = vpop.permute.xlu0 %1369
        %1373 = vset.pattern.permute.xlu0 0
        %1374 = vperm.xlu0 %1373, %v1348
        %v1375 = vpop.permute.xlu0 %1374
        %1378 = vset.pattern.permute.xlu0 0
        %1379 = vperm.xlu0 %1378, %v1349
        %v1380 = vpop.permute.xlu0 %1379
        %1383 = vset.pattern.permute.xlu0 0
        %1384 = vperm.xlu0 %1383, %v1350
        %v1385 = vpop.permute.xlu0 %1384
        %1388 = vset.pattern.permute.xlu0 0
        %1389 = vperm.xlu0 %1388, %v1351
        %v1390 = vpop.permute.xlu0 %1389
        %1393 = vset.pattern.permute.xlu0 0
        %1394 = vperm.xlu0 %1393, %v1352
        %v1395 = vpop.permute.xlu0 %1394
        %1398 = vset.pattern.permute.xlu0 0
        %1399 = vperm.xlu0 %1398, %v1353
        %v1400 = vpop.permute.xlu0 %1399
        %1403 = vset.pattern.permute.xlu0 0
        %1404 = vperm.xlu0 %1403, %v1354
        %v1405 = vpop.permute.xlu0 %1404
        %1408 = vset.pattern.permute.xlu0 0
        %1409 = vperm.xlu0 %1408, %v1355
        %v1410 = vpop.permute.xlu0 %1409
        %1413 = vset.pattern.permute.xlu0 0
        %1414 = vperm.xlu0 %1413, %v1356
        %v1415 = vpop.permute.xlu0 %1414
        %1418 = vset.pattern.permute.xlu0 0
        %1419 = vperm.xlu0 %1418, %v1357
        %v1420 = vpop.permute.xlu0 %1419
        %1423 = vset.pattern.permute.xlu0 0
        %1424 = vperm.xlu0 %1423, %v1358
        %v1425 = vpop.permute.xlu0 %1424
        %1428 = vset.pattern.permute.xlu0 0
        %1429 = vperm.xlu0 %1428, %v1359
        %v1430 = vpop.permute.xlu0 %1429
        %1433 = vset.pattern.permute.xlu0 0
        %1434 = vperm.xlu0 %1433, %v1360
        %v1435 = vpop.permute.xlu0 %1434
        %1438 = vset.pattern.permute.xlu0 0
        %1439 = vperm.xlu0 %1438, %v1361
        %v1440 = vpop.permute.xlu0 %1439
        %v1458 = vunpack.c.l.b16 %v1330
        %v1459 = vunpack.c.l.b16 %v1331
        %v1460 = vunpack.c.l.b16 %v1332
        %v1461 = vunpack.c.l.b16 %v1333
        %v1462 = vunpack.c.l.b16 %v1334
        %v1463 = vunpack.c.l.b16 %v1335
        %v1464 = vunpack.c.l.b16 %v1336
        %v1465 = vunpack.c.l.b16 %v1337
        %v1466 = vunpack.c.l.b16 %v1338
        %v1467 = vunpack.c.l.b16 %v1339
        %v1468 = vunpack.c.l.b16 %v1340
        %v1469 = vunpack.c.l.b16 %v1341
        %v1470 = vunpack.c.l.b16 %v1342
        %v1471 = vunpack.c.l.b16 %v1343
        %v1472 = vunpack.c.l.b16 %v1344
        %v1473 = vunpack.c.l.b16 %v1345
        %v1474 = vpack.c.b16 %v1459, %v1458
        %v1475 = vpack.c.b16 %v1461, %v1460
        %v1476 = vpack.c.b16 %v1463, %v1462
        %v1477 = vpack.c.b16 %v1465, %v1464
        %v1478 = vpack.c.b16 %v1467, %v1466
        %v1479 = vpack.c.b16 %v1469, %v1468
        %v1480 = vpack.c.b16 %v1471, %v1470
        %v1481 = vpack.c.b16 %v1473, %v1472
        %1490 = vmatprep.subr.bf16.mxu0 0
        %1491 = vmatpush1.bf16.msra.mxu0 %v1322
        %1492 = vmatprep.subr.bf16.mxu0 0
        %1493 = vmatpush1.bf16.msra.mxu0 %v1323
        %1494 = vmatprep.subr.bf16.mxu0 0
        %1495 = vmatpush1.bf16.msra.mxu0 %v1324
        %1496 = vmatprep.subr.bf16.mxu0 0
        %1497 = vmatpush1.bf16.msra.mxu0 %v1325
        %1498 = vmatprep.subr.bf16.mxu0 0
        %1499 = vmatpush1.bf16.msra.mxu0 %v1326
        %1500 = vmatprep.subr.bf16.mxu0 0
        %1501 = vmatpush1.bf16.msra.mxu0 %v1327
        %1502 = vmatprep.subr.bf16.mxu0 0
        %1503 = vmatpush1.bf16.msra.mxu0 %v1328
        %1504 = vmatprep.subr.bf16.mxu0 0
        %1505 = vmatpush1.bf16.msra.mxu0 %v1329
        %1506 = vmatprep.subr.bf16.mxu0 0
        %1507 = vmatpush1.bf16.msra.mxu0 0
        %1508 = vmatprep.subr.bf16.mxu0 0
        %1509 = vmatpush1.bf16.msra.mxu0 0
        %1510 = vmatprep.subr.bf16.mxu0 0
        %1511 = vmatpush1.bf16.msra.mxu0 0
        %1512 = vmatprep.subr.bf16.mxu0 0
        %1513 = vmatpush1.bf16.msra.mxu0 0
        %1514 = vmatprep.subr.bf16.mxu0 0
        %1515 = vmatpush1.bf16.msra.mxu0 0
        %1516 = vmatprep.subr.bf16.mxu0 0
        %1517 = vmatpush1.bf16.msra.mxu0 0
        %1518 = vmatprep.subr.bf16.mxu0 0
        %1519 = vmatpush1.bf16.msra.mxu0 0
        %1520 = vmatprep.subr.bf16.mxu0 0
        %1521 = vmatpush1.bf16.msra.mxu0 0
        %1522 = vmatprep.mubr.bf16.mxu0 0
        %1523 = vmatmul.mubr.bf16.gmra.mrb[0].mxu0 %v1474
        %v1524 = vpop.f32.mrb[0].mxu0
        %v1525 = vadd.f32 %v1365, %v1524
        %v1526 = vpop.f32.mrb[0].mxu0
        %v1527 = vpop.f32.mrb[0].mxu0
        %v1528 = vadd.f32 %v1370, %v1527
        %v1529 = vpop.f32.mrb[0].mxu0
        %1530 = vmatprep.mubr.bf16.mxu0 0
        %1531 = vmatmul.mubr.bf16.gmra.mrb[0].mxu0 %v1475
        %v1532 = vpop.f32.mrb[0].mxu0
        %v1533 = vadd.f32 %v1375, %v1532
        %v1534 = vpop.f32.mrb[0].mxu0
        %v1535 = vpop.f32.mrb[0].mxu0
        %v1536 = vadd.f32 %v1380, %v1535
        %v1537 = vpop.f32.mrb[0].mxu0
        %1538 = vmatprep.mubr.bf16.mxu0 0
        %1539 = vmatmul.mubr.bf16.gmra.mrb[0].mxu0 %v1476
        %v1540 = vpop.f32.mrb[0].mxu0
        %v1541 = vadd.f32 %v1385, %v1540
        %v1542 = vpop.f32.mrb[0].mxu0
        %v1543 = vpop.f32.mrb[0].mxu0
        %v1544 = vadd.f32 %v1390, %v1543
        %v1545 = vpop.f32.mrb[0].mxu0
        %1546 = vmatprep.mubr.bf16.mxu0 0
        %1547 = vmatmul.mubr.bf16.gmra.mrb[0].mxu0 %v1477
        %v1548 = vpop.f32.mrb[0].mxu0
        %v1549 = vadd.f32 %v1395, %v1548
        %v1550 = vpop.f32.mrb[0].mxu0
        %v1551 = vpop.f32.mrb[0].mxu0
        %v1552 = vadd.f32 %v1400, %v1551
        %v1553 = vpop.f32.mrb[0].mxu0
        %1554 = vmatprep.mubr.bf16.mxu0 0
        %1555 = vmatmul.mubr.bf16.gmra.mrb[0].mxu0 %v1478
        %v1556 = vpop.f32.mrb[0].mxu0
        %v1557 = vadd.f32 %v1405, %v1556
        %v1558 = vpop.f32.mrb[0].mxu0
        %v1559 = vpop.f32.mrb[0].mxu0
        %v1560 = vadd.f32 %v1410, %v1559
        %v1561 = vpop.f32.mrb[0].mxu0
        %1562 = vmatprep.mubr.bf16.mxu0 0
        %1563 = vmatmul.mubr.bf16.gmra.mrb[0].mxu0 %v1479
        %v1564 = vpop.f32.mrb[0].mxu0
        %v1565 = vadd.f32 %v1415, %v1564
        %v1566 = vpop.f32.mrb[0].mxu0
        %v1567 = vpop.f32.mrb[0].mxu0
        %v1568 = vadd.f32 %v1420, %v1567
        %v1569 = vpop.f32.mrb[0].mxu0
        %1570 = vmatprep.mubr.bf16.mxu0 0
        %1571 = vmatmul.mubr.bf16.gmra.mrb[0].mxu0 %v1480
        %v1572 = vpop.f32.mrb[0].mxu0
        %v1573 = vadd.f32 %v1425, %v1572
        %v1574 = vpop.f32.mrb[0].mxu0
        %v1575 = vpop.f32.mrb[0].mxu0
        %v1576 = vadd.f32 %v1430, %v1575
        %v1577 = vpop.f32.mrb[0].mxu0
        %1578 = vmatprep.mubr.bf16.mxu0 0
        %1579 = vmatmul.mubr.bf16.gmra.mrb[0].mxu0 %v1481
        %v1580 = vpop.f32.mrb[0].mxu0
        %v1581 = vadd.f32 %v1435, %v1580
        %v1582 = vpop.f32.mrb[0].mxu0
        %v1583 = vpop.f32.mrb[0].mxu0
        %v1584 = vadd.f32 %v1440, %v1583
        %v1585 = vpop.f32.mrb[0].mxu0
        %1586 = vdwg.mxu0
        %v1587 = vtanh.pop %v1525
        %v1588 = vtanh.pop %v1528
        %v1589 = vtanh.pop %v1533
        %v1590 = vtanh.pop %v1536
        %v1591 = vtanh.pop %v1541
        %v1592 = vtanh.pop %v1544
        %v1593 = vtanh.pop %v1549
        %v1594 = vtanh.pop %v1552
        %v1595 = vtanh.pop %v1557
        %v1596 = vtanh.pop %v1560
        %v1597 = vtanh.pop %v1565
        %v1598 = vtanh.pop %v1568
        %v1599 = vtanh.pop %v1573
        %v1600 = vtanh.pop %v1576
        %v1601 = vtanh.pop %v1581
        %v1602 = vtanh.pop %v1584
        %v1603 = vpack.c.bf16 %v1588, %v1587
        %v1604 = vpack.c.bf16 %v1590, %v1589
        %v1605 = vpack.c.bf16 %v1592, %v1591
        %v1606 = vpack.c.bf16 %v1594, %v1593
        %v1607 = vpack.c.bf16 %v1596, %v1595
        %v1608 = vpack.c.bf16 %v1598, %v1597
        %v1609 = vpack.c.bf16 %v1600, %v1599
        %v1610 = vpack.c.bf16 %v1602, %v1601
        %v1611 = vld [vmem:[%s9] sm:$0xf]
        %v1612 = vld [vmem:[%s9 + $0x4] sm:$0xf]
        %v1613 = vld [vmem:[%s9 + $0x8] sm:$0xf]
        %v1614 = vld [vmem:[%s9 + $0xc] sm:$0xf]
        %v1615 = vld [vmem:[%s9 + $0x10] sm:$0xf]
        %v1616 = vld [vmem:[%s9 + $0x14] sm:$0xf]
        %v1617 = vld [vmem:[%s9 + $0x18] sm:$0xf]
        %v1618 = vld [vmem:[%s9 + $0x1c] sm:$0xf]
        %v1619 = vld [vmem:[%s9 + $0x20] sm:$0xf]
        %v1620 = vld [vmem:[%s9 + $0x24] sm:$0xf]
        %v1621 = vld [vmem:[%s9 + $0x28] sm:$0xf]
        %v1622 = vld [vmem:[%s9 + $0x2c] sm:$0xf]
        %v1623 = vld [vmem:[%s9 + $0x30] sm:$0xf]
        %v1624 = vld [vmem:[%s9 + $0x34] sm:$0xf]
        %v1625 = vld [vmem:[%s9 + $0x38] sm:$0xf]
        %v1626 = vld [vmem:[%s9 + $0x3c] sm:$0xf]
        %v1627 = vld [vmem:[%s10] sm:$0xff]
        %v1628 = vld [vmem:[%s10 + $0x8] sm:$0xff]
        %v1629 = vld [vmem:[%s10 + $0x10] sm:$0xff]
        %v1630 = vld [vmem:[%s10 + $0x18] sm:$0xff]
        %v1631 = vld [vmem:[%s10 + $0x20] sm:$0xff]
        %v1632 = vld [vmem:[%s10 + $0x28] sm:$0xff]
        %v1633 = vld [vmem:[%s10 + $0x30] sm:$0xff]
        %v1634 = vld [vmem:[%s10 + $0x38] sm:$0xff]
        %v1635 = vld [vmem:[%s10 + $0x40] sm:$0xff]
        %v1636 = vld [vmem:[%s10 + $0x48] sm:$0xff]
        %v1637 = vld [vmem:[%s10 + $0x50] sm:$0xff]
        %v1638 = vld [vmem:[%s10 + $0x58] sm:$0xff]
        %v1639 = vld [vmem:[%s10 + $0x60] sm:$0xff]
        %v1640 = vld [vmem:[%s10 + $0x68] sm:$0xff]
        %v1641 = vld [vmem:[%s10 + $0x70] sm:$0xff]
        %v1642 = vld [vmem:[%s10 + $0x78] sm:$0xff]
        %1644 = vset.pattern.permute.xlu0 0
        %1645 = vperm.xlu0 %1644, %v1627
        %v1646 = vpop.permute.xlu0 %1645
        %1649 = vset.pattern.permute.xlu0 0
        %1650 = vperm.xlu0 %1649, %v1628
        %v1651 = vpop.permute.xlu0 %1650
        %1654 = vset.pattern.permute.xlu0 0
        %1655 = vperm.xlu0 %1654, %v1629
        %v1656 = vpop.permute.xlu0 %1655
        %1659 = vset.pattern.permute.xlu0 0
        %1660 = vperm.xlu0 %1659, %v1630
        %v1661 = vpop.permute.xlu0 %1660
        %1664 = vset.pattern.permute.xlu0 0
        %1665 = vperm.xlu0 %1664, %v1631
        %v1666 = vpop.permute.xlu0 %1665
        %1669 = vset.pattern.permute.xlu0 0
        %1670 = vperm.xlu0 %1669, %v1632
        %v1671 = vpop.permute.xlu0 %1670
        %1674 = vset.pattern.permute.xlu0 0
        %1675 = vperm.xlu0 %1674, %v1633
        %v1676 = vpop.permute.xlu0 %1675
        %1679 = vset.pattern.permute.xlu0 0
        %1680 = vperm.xlu0 %1679, %v1634
        %v1681 = vpop.permute.xlu0 %1680
        %1684 = vset.pattern.permute.xlu0 0
        %1685 = vperm.xlu0 %1684, %v1635
        %v1686 = vpop.permute.xlu0 %1685
        %1689 = vset.pattern.permute.xlu0 0
        %1690 = vperm.xlu0 %1689, %v1636
        %v1691 = vpop.permute.xlu0 %1690
        %1694 = vset.pattern.permute.xlu0 0
        %1695 = vperm.xlu0 %1694, %v1637
        %v1696 = vpop.permute.xlu0 %1695
        %1699 = vset.pattern.permute.xlu0 0
        %1700 = vperm.xlu0 %1699, %v1638
        %v1701 = vpop.permute.xlu0 %1700
        %1704 = vset.pattern.permute.xlu0 0
        %1705 = vperm.xlu0 %1704, %v1639
        %v1706 = vpop.permute.xlu0 %1705
        %1709 = vset.pattern.permute.xlu0 0
        %1710 = vperm.xlu0 %1709, %v1640
        %v1711 = vpop.permute.xlu0 %1710
        %1714 = vset.pattern.permute.xlu0 0
        %1715 = vperm.xlu0 %1714, %v1641
        %v1716 = vpop.permute.xlu0 %1715
        %1719 = vset.pattern.permute.xlu0 0
        %1720 = vperm.xlu0 %1719, %v1642
        %v1721 = vpop.permute.xlu0 %1720
        %v1739 = vunpack.c.l.b16 %v1611
        %v1740 = vunpack.c.l.b16 %v1612
        %v1741 = vunpack.c.l.b16 %v1613
        %v1742 = vunpack.c.l.b16 %v1614
        %v1743 = vunpack.c.l.b16 %v1615
        %v1744 = vunpack.c.l.b16 %v1616
        %v1745 = vunpack.c.l.b16 %v1617
        %v1746 = vunpack.c.l.b16 %v1618
        %v1747 = vunpack.c.l.b16 %v1619
        %v1748 = vunpack.c.l.b16 %v1620
        %v1749 = vunpack.c.l.b16 %v1621
        %v1750 = vunpack.c.l.b16 %v1622
        %v1751 = vunpack.c.l.b16 %v1623
        %v1752 = vunpack.c.l.b16 %v1624
        %v1753 = vunpack.c.l.b16 %v1625
        %v1754 = vunpack.c.l.b16 %v1626
        %v1755 = vpack.c.b16 %v1740, %v1739
        %v1756 = vpack.c.b16 %v1742, %v1741
        %v1757 = vpack.c.b16 %v1744, %v1743
        %v1758 = vpack.c.b16 %v1746, %v1745
        %v1759 = vpack.c.b16 %v1748, %v1747
        %v1760 = vpack.c.b16 %v1750, %v1749
        %v1761 = vpack.c.b16 %v1752, %v1751
        %v1762 = vpack.c.b16 %v1754, %v1753
        %1771 = vmatprep.subr.bf16.mxu0 0
        %1772 = vmatpush1.bf16.msra.mxu0 %v1603
        %1773 = vmatprep.subr.bf16.mxu0 0
        %1774 = vmatpush1.bf16.msra.mxu0 %v1604
        %1775 = vmatprep.subr.bf16.mxu0 0
        %1776 = vmatpush1.bf16.msra.mxu0 %v1605
        %1777 = vmatprep.subr.bf16.mxu0 0
        %1778 = vmatpush1.bf16.msra.mxu0 %v1606
        %1779 = vmatprep.subr.bf16.mxu0 0
        %1780 = vmatpush1.bf16.msra.mxu0 %v1607
        %1781 = vmatprep.subr.bf16.mxu0 0
        %1782 = vmatpush1.bf16.msra.mxu0 %v1608
        %1783 = vmatprep.subr.bf16.mxu0 0
        %1784 = vmatpush1.bf16.msra.mxu0 %v1609
        %1785 = vmatprep.subr.bf16.mxu0 0
        %1786 = vmatpush1.bf16.msra.mxu0 %v1610
        %1787 = vmatprep.subr.bf16.mxu0 0
        %1788 = vmatpush1.bf16.msra.mxu0 0
        %1789 = vmatprep.subr.bf16.mxu0 0
        %1790 = vmatpush1.bf16.msra.mxu0 0
        %1791 = vmatprep.subr.bf16.mxu0 0
        %1792 = vmatpush1.bf16.msra.mxu0 0
        %1793 = vmatprep.subr.bf16.mxu0 0
        %1794 = vmatpush1.bf16.msra.mxu0 0
        %1795 = vmatprep.subr.bf16.mxu0 0
        %1796 = vmatpush1.bf16.msra.mxu0 0
        %1797 = vmatprep.subr.bf16.mxu0 0
        %1798 = vmatpush1.bf16.msra.mxu0 0
        %1799 = vmatprep.subr.bf16.mxu0 0
        %1800 = vmatpush1.bf16.msra.mxu0 0
        %1801 = vmatprep.subr.bf16.mxu0 0
        %1802 = vmatpush1.bf16.msra.mxu0 0
        %1803 = vmatprep.mubr.bf16.mxu0 0
        %1804 = vmatmul.mubr.bf16.gmra.mrb[0].mxu0 %v1755
        %v1805 = vpop.f32.mrb[0].mxu0
        %v1806 = vadd.f32 %v1646, %v1805
        %v1807 = vpop.f32.mrb[0].mxu0
        %v1808 = vpop.f32.mrb[0].mxu0
        %v1809 = vadd.f32 %v1651, %v1808
        %v1810 = vpop.f32.mrb[0].mxu0
        %1811 = vmatprep.mubr.bf16.mxu0 0
        %1812 = vmatmul.mubr.bf16.gmra.mrb[0].mxu0 %v1756
        %v1813 = vpop.f32.mrb[0].mxu0
        %v1814 = vadd.f32 %v1656, %v1813
        %v1815 = vpop.f32.mrb[0].mxu0
        %v1816 = vpop.f32.mrb[0].mxu0
        %v1817 = vadd.f32 %v1661, %v1816
        %v1818 = vpop.f32.mrb[0].mxu0
        %1819 = vmatprep.mubr.bf16.mxu0 0
        %1820 = vmatmul.mubr.bf16.gmra.mrb[0].mxu0 %v1757
        %v1821 = vpop.f32.mrb[0].mxu0
        %v1822 = vadd.f32 %v1666, %v1821
        %v1823 = vpop.f32.mrb[0].mxu0
        %v1824 = vpop.f32.mrb[0].mxu0
        %v1825 = vadd.f32 %v1671, %v1824
        %v1826 = vpop.f32.mrb[0].mxu0
        %1827 = vmatprep.mubr.bf16.mxu0 0
        %1828 = vmatmul.mubr.bf16.gmra.mrb[0].mxu0 %v1758
        %v1829 = vpop.f32.mrb[0].mxu0
        %v1830 = vadd.f32 %v1676, %v1829
        %v1831 = vpop.f32.mrb[0].mxu0
        %v1832 = vpop.f32.mrb[0].mxu0
        %v1833 = vadd.f32 %v1681, %v1832
        %v1834 = vpop.f32.mrb[0].mxu0
        %1835 = vmatprep.mubr.bf16.mxu0 0
        %1836 = vmatmul.mubr.bf16.gmra.mrb[0].mxu0 %v1759
        %v1837 = vpop.f32.mrb[0].mxu0
        %v1838 = vadd.f32 %v1686, %v1837
        %v1839 = vpop.f32.mrb[0].mxu0
        %v1840 = vpop.f32.mrb[0].mxu0
        %v1841 = vadd.f32 %v1691, %v1840
        %v1842 = vpop.f32.mrb[0].mxu0
        %1843 = vmatprep.mubr.bf16.mxu0 0
        %1844 = vmatmul.mubr.bf16.gmra.mrb[0].mxu0 %v1760
        %v1845 = vpop.f32.mrb[0].mxu0
        %v1846 = vadd.f32 %v1696, %v1845
        %v1847 = vpop.f32.mrb[0].mxu0
        %v1848 = vpop.f32.mrb[0].mxu0
        %v1849 = vadd.f32 %v1701, %v1848
        %v1850 = vpop.f32.mrb[0].mxu0
        %1851 = vmatprep.mubr.bf16.mxu0 0
        %1852 = vmatmul.mubr.bf16.gmra.mrb[0].mxu0 %v1761
        %v1853 = vpop.f32.mrb[0].mxu0
        %v1854 = vadd.f32 %v1706, %v1853
        %v1855 = vpop.f32.mrb[0].mxu0
        %v1856 = vpop.f32.mrb[0].mxu0
        %v1857 = vadd.f32 %v1711, %v1856
        %v1858 = vpop.f32.mrb[0].mxu0
        %1859 = vmatprep.mubr.bf16.mxu0 0
        %1860 = vmatmul.mubr.bf16.gmra.mrb[0].mxu0 %v1762
        %v1861 = vpop.f32.mrb[0].mxu0
        %v1862 = vadd.f32 %v1716, %v1861
        %v1863 = vpop.f32.mrb[0].mxu0
        %v1864 = vpop.f32.mrb[0].mxu0
        %v1865 = vadd.f32 %v1721, %v1864
        %v1866 = vpop.f32.mrb[0].mxu0
        %1867 = vdwg.mxu0
        %v1868 = vtanh.pop %v1806
        %v1869 = vtanh.pop %v1809
        %v1870 = vtanh.pop %v1814
        %v1871 = vtanh.pop %v1817
        %v1872 = vtanh.pop %v1822
        %v1873 = vtanh.pop %v1825
        %v1874 = vtanh.pop %v1830
        %v1875 = vtanh.pop %v1833
        %v1876 = vtanh.pop %v1838
        %v1877 = vtanh.pop %v1841
        %v1878 = vtanh.pop %v1846
        %v1879 = vtanh.pop %v1849
        %v1880 = vtanh.pop %v1854
        %v1881 = vtanh.pop %v1857
        %v1882 = vtanh.pop %v1862
        %v1883 = vtanh.pop %v1865
        %v1884 = vpack.c.bf16 %v1869, %v1868
        %v1885 = vpack.c.bf16 %v1871, %v1870
        %v1886 = vpack.c.bf16 %v1873, %v1872
        %v1887 = vpack.c.bf16 %v1875, %v1874
        %v1888 = vpack.c.bf16 %v1877, %v1876
        %v1889 = vpack.c.bf16 %v1879, %v1878
        %v1890 = vpack.c.bf16 %v1881, %v1880
        %v1891 = vpack.c.bf16 %v1883, %v1882
        %v1892 = vld [vmem:[%s11] sm:$0xf]
        %v1893 = vld [vmem:[%s12] sm:$0xff]
        %1895 = vset.pattern.permute.xlu0 0
        %1896 = vperm.xlu0 %1895, %v1893
        %v1897 = vpop.permute.xlu0 %1896
        %1899 = vmatprep.subr.bf16.mxu0 0
        %1900 = vmatpush1.bf16.msra.mxu0 %v1884
        %1901 = vmatprep.subr.bf16.mxu0 0
        %1902 = vmatpush1.bf16.msra.mxu0 %v1885
        %1903 = vmatprep.subr.bf16.mxu0 0
        %1904 = vmatpush1.bf16.msra.mxu0 %v1886
        %1905 = vmatprep.subr.bf16.mxu0 0
        %1906 = vmatpush1.bf16.msra.mxu0 %v1887
        %1907 = vmatprep.subr.bf16.mxu0 0
        %1908 = vmatpush1.bf16.msra.mxu0 %v1888
        %1909 = vmatprep.subr.bf16.mxu0 0
        %1910 = vmatpush1.bf16.msra.mxu0 %v1889
        %1911 = vmatprep.subr.bf16.mxu0 0
        %1912 = vmatpush1.bf16.msra.mxu0 %v1890
        %1913 = vmatprep.subr.bf16.mxu0 0
        %1914 = vmatpush1.bf16.msra.mxu0 %v1891
        %1915 = vmatprep.subr.bf16.mxu0 0
        %1916 = vmatpush1.bf16.msra.mxu0 0
        %1917 = vmatprep.subr.bf16.mxu0 0
        %1918 = vmatpush1.bf16.msra.mxu0 0
        %1919 = vmatprep.subr.bf16.mxu0 0
        %1920 = vmatpush1.bf16.msra.mxu0 0
        %1921 = vmatprep.subr.bf16.mxu0 0
        %1922 = vmatpush1.bf16.msra.mxu0 0
        %1923 = vmatprep.subr.bf16.mxu0 0
        %1924 = vmatpush1.bf16.msra.mxu0 0
        %1925 = vmatprep.subr.bf16.mxu0 0
        %1926 = vmatpush1.bf16.msra.mxu0 0
        %1927 = vmatprep.subr.bf16.mxu0 0
        %1928 = vmatpush1.bf16.msra.mxu0 0
        %1929 = vmatprep.subr.bf16.mxu0 0
        %1930 = vmatpush1.bf16.msra.mxu0 0
        %1931 = vmatprep.mubr.bf16.mxu0 0
        %1932 = vmatmul.mubr.bf16.gmra.mrb[0].mxu0 %v1892
        %v1933 = vpop.f32.mrb[0].mxu0
        %v1934 = vadd.f32 %v1897, %v1933
        %v1935 = vpop.f32.mrb[0].mxu0
        %v1936 = vpop.f32.mrb[0].mxu0
        %v1937 = vpop.f32.mrb[0].mxu0
        %1938 = vdwg.mxu0
        %1939 = vst [vmem:[%s431] sm:$0xff] %v1934
        %s1940 = sand.u32 %s313, 1
        %s1941 = scalar_lea.sflag [#allocation3], %s1940
        %s1942 = sand.u32 %s313, 1
        %s1943 = smul.addr %s1942, 8
        %s1944 = scalar_lea.vmem [#allocation2], %s1943
        // Predicated region
        $region73: #{tpu_custom_call.1} parent=71 // pred_check
          %p1945 = pneg %p323
        $region74: #{tpu_custom_call.1} parent=71 // pred_check_branch
          %1947 = sbr.rel (%p1945) target = $region76
        $region75: #{tpu_custom_call.1} parent=71 // pred_region
          %s1949 = ssub.s32 128, 128
          %1950 = vsyncadd %s1941, %s1949
          %s1951 = smul.addr %s27, 128
          %s1952 = scalar_lea.hbm %s13, %s1951
          %s1954 = sshll.u32 %s1944, 4
          %s1955 = int_to_ptr.vmem [resolvable:$true] %s1954
          %1957 = dma.vmem_to_hbm [thread:$0]  %s1955, 128, %s1952, %s1941
        $region76: #{tpu_custom_call.1} parent=71 // pred_fallthru
          _
      $region72: #{tpu_custom_call.1} parent=5 // pred_fallthru
        _
      %p1958 = scmp.le.s32.totalorder 2, %s22
      // Predicated region
      $region77: #{tpu_custom_call.1} parent=5 // pred_check
        %p1959 = pneg %p1958
      $region78: #{tpu_custom_call.1} parent=5 // pred_check_branch
        %1961 = sbr.rel (%p1959) target = $region80
      $region79: #{tpu_custom_call.1} parent=5 // pred_region
        %s1962 = ssub.s32 %s22, 2
        // Predicated region
        $region81: #{tpu_custom_call.1} parent=79 // pred_check
          %p1963 = pneg %p329
        $region82: #{tpu_custom_call.1} parent=79 // pred_check_branch
          %1965 = sbr.rel (%p1963) target = $region84
        $region83: #{tpu_custom_call.1} parent=79 // pred_region
          %s1966 = sand.u32 %s314, 1
          %s1967 = scalar_lea.sflag [#allocation3], %s1966
          %s1968 = sand.u32 %s314, 1
          %s1969 = smul.addr %s1968, 8
          %s1970 = scalar_lea.vmem [#allocation2], %s1969
          %1971 = dma.done %s1967, 128
        $region84: #{tpu_custom_call.1} parent=79 // pred_fallthru
          _
      $region80: #{tpu_custom_call.1} parent=5 // pred_fallthru
        _
    $region6: #{tpu_custom_call.1} parent=1 // loop_footer
      %s26 = sadd.s32 1, %s22
    $region7: #{tpu_custom_call.1} parent=1 // loop_footer_branch
      %21 = sbr.rel target = $region3
    $region8: #{tpu_custom_call.1} parent=1 // loop_exit
      _
    %1972 = vsyncpa [#allocation3], 1
    %s1973 = scalar_lea.sflag [#allocation3], 1
    %1974 = vsyncpa %s1973, 1

</llo_original>
